<compile_context>
chip_gen: v5e
topology: v5e:2x2
jax: 0.10.0
libtpu: 0.0.40
codegen_flags: <defaults>
</compile_context>

<pallas_src>
import jax
import jax.numpy as jnp
from jax.experimental import pallas as pl
from jax.experimental.pallas import tpu as pltpu


def content_mlp_kernel(u_ref, i_ref, w1u_ref, w1i_ref, b1_ref,
                       w2_ref, b2_ref, w3_ref, b3_ref, out_ref):
    # In-kernel bf16 cast of the activation streams (VPU, hidden under the
    # MXU work); weights are already bf16; accumulation is f32.
    u = u_ref[...].astype(jnp.bfloat16)
    i = i_ref[...].astype(jnp.bfloat16)

    # Layer 1: fused concat-matmul (u @ W1u + i @ W1i), bf16 x bf16 -> f32 acc.
    h1 = (jnp.dot(u, w1u_ref[...], preferred_element_type=jnp.float32)
          + jnp.dot(i, w1i_ref[...], preferred_element_type=jnp.float32)
          + b1_ref[...])
    h1 = jnp.maximum(h1, 0.0)

    # Layer 2: bf16 activations into the MXU, f32 accumulation, f32 bias/ReLU.
    h2 = (jnp.dot(h1.astype(jnp.bfloat16), w2_ref[...],
                  preferred_element_type=jnp.float32)
          + b2_ref[...])
    h2 = jnp.maximum(h2, 0.0)

    # Layer 3 (out_features == 1): VPU multiply + lane reduction (XLU) instead
    # of a 1-column MXU matmul.  w3 is stored as a (1, half) f32 row.
    logit = jnp.sum(h2 * w3_ref[...], axis=-1, keepdims=True) + b3_ref[...]
    out_ref[...] = jax.nn.sigmoid(logit)


def content_mlp_forward(uemb, iemb, params, *, block_b=None):
    """ContentMLP forward.  uemb/iemb: (B, emb_dim).  Returns (B,) float32.

    `params` must come from `prepare_params` (big weights pre-cast to bf16).
    """
    B, emb_dim = uemb.shape
    w1u, w1i, b1, w2, b2, w3, b3 = params
    hidden = w1u.shape[1]
    half = w2.shape[1]

    if block_b is None:
        # Large batches: big tiles (<=2048 rows) amortize the ~0.35us per-step
        # overhead.  Small batches: keep ~8 grid steps so v7x's two TCs get
        # >=4 steps each and the DMA pipeline can overlap with compute.
        block_b = int(min(2048, max(128, pl.next_power_of_2(pl.cdiv(B, 8)))))
    n_blocks = pl.cdiv(B, block_b)

    # Advisory cost estimate so XLA can schedule neighbors around the call.
    in_itemsize = jnp.dtype(uemb.dtype).itemsize
    flops = 2 * B * (2 * emb_dim * hidden + hidden * half + half)
    bytes_accessed = (
        2 * B * emb_dim * in_itemsize                  # embedding streams
        + (2 * emb_dim * hidden + hidden * half) * 2   # bf16 weights
        + (hidden + half + half + 1) * 4               # f32 biases + w3 row
        + B * 4)                                       # f32 output
    cost = pl.CostEstimate(flops=flops, transcendentals=B,
                           bytes_accessed=bytes_accessed)

    out = pl.pallas_call(
        content_mlp_kernel,
        out_shape=jax.ShapeDtypeStruct((B, 1), jnp.float32),
        grid_spec=pltpu.PrefetchScalarGridSpec(
            num_scalar_prefetch=0,
            grid=(n_blocks,),
            in_specs=[
                # batch-tiled activation streams (ragged last block is masked
                # by Pallas; see invariant note at the top of the file)
                pl.BlockSpec((block_b, emb_dim), lambda b: (b, 0)),
                pl.BlockSpec((block_b, emb_dim), lambda b: (b, 0)),
                # weights / biases: full arrays with a constant block index, so
                # they are fetched once and reused for every batch tile.
                pl.BlockSpec((emb_dim, hidden), lambda b: (0, 0)),
                pl.BlockSpec((emb_dim, hidden), lambda b: (0, 0)),
                pl.BlockSpec((1, hidden), lambda b: (0, 0)),
                pl.BlockSpec((hidden, half), lambda b: (0, 0)),
                pl.BlockSpec((1, half), lambda b: (0, 0)),
                pl.BlockSpec((1, half), lambda b: (0, 0)),
                pl.BlockSpec((1, 1), lambda b: (0, 0)),
            ],
            out_specs=pl.BlockSpec((block_b, 1), lambda b: (b, 0)),
        ),
        compiler_params=pltpu.CompilerParams(
            dimension_semantics=("parallel",),
            vmem_limit_bytes=32 * 1024 * 1024),
        cost_estimate=cost,
    )(uemb, iemb, w1u, w1i, b1, w2, b2, w3, b3)

    return out[:, 0]


def init_params(key, emb_dim=384, hidden=256, dtype=jnp.float32):
    """Deterministic synthetic f32 parameters matching ContentMLP shapes.

    Weights are stored transposed relative to torch (in_features, out_features);
    the first layer's weight is pre-split into uemb / iemb halves, and the
    final layer's weight is stored as a (1, half) row for the VPU path.
    """
    half = hidden // 2
    ks = jax.random.split(key, 7)
    s1 = 1.0 / jnp.sqrt(2.0 * emb_dim)
    s2 = 1.0 / jnp.sqrt(float(hidden))
    s3 = 1.0 / jnp.sqrt(float(half))
    w1u = jax.random.normal(ks[0], (emb_dim, hidden), dtype) * s1
    w1i = jax.random.normal(ks[1], (emb_dim, hidden), dtype) * s1
    b1 = jax.random.normal(ks[2], (1, hidden), dtype) * s1
    w2 = jax.random.normal(ks[3], (hidden, half), dtype) * s2
    b2 = jax.random.normal(ks[4], (1, half), dtype) * s2
    w3 = jax.random.normal(ks[5], (1, half), dtype) * s3
    b3 = jax.random.normal(ks[6], (1, 1), dtype) * s3
    return (w1u, w1i, b1, w2, b2, w3, b3)


def prepare_params(params):
    """One-time (load-time) cast of the big matmul weights to bf16.

    Done once per parameter set, NOT per forward call, so no per-call convert
    ops hit HBM.  Biases and the tiny w3 row stay f32 so elementwise math and
    the final lane-reduction are f32.
    """
    w1u, w1i, b1, w2, b2, w3, b3 = params
    return (w1u.astype(jnp.bfloat16), w1i.astype(jnp.bfloat16), b1,
            w2.astype(jnp.bfloat16), b2, w3, b3)


def reference_forward(uemb, iemb, params, *, mixed_precision=True):
    """Pure-JAX reference matching the PyTorch forward (eval mode).

    mixed_precision=True mirrors the kernel's bf16-inputs / f32-accumulation
    casting exactly; False is the plain f32 reference of the original module.
    Takes the f32 params from init_params.
    """
    w1u, w1i, b1, w2, b2, w3, b3 = params
    cast = (lambda a: a.astype(jnp.bfloat16)) if mixed_precision else (lambda a: a)
    u, i = cast(uemb), cast(iemb)
    h1 = (jnp.dot(u, cast(w1u), preferred_element_type=jnp.float32)
          + jnp.dot(i, cast(w1i), preferred_element_type=jnp.float32) + b1)
    h1 = jax.nn.relu(h1)
    h2 = jnp.dot(cast(h1), cast(w2), preferred_element_type=jnp.float32) + b2
    h2 = jax.nn.relu(h2)
    logit = jnp.sum(h2 * w3, axis=-1, keepdims=True) + b3
    return jax.nn.sigmoid(logit).squeeze(1)


if __name__ == "__main__":
    # B not a multiple of the tile -> exercises the ragged (masked) last block.
    B, emb_dim, hidden = 1000, 384, 256
    key = jax.random.PRNGKey(0)
    k_u, k_i, k_p = jax.random.split(key, 3)

    uemb = jax.random.normal(k_u, (B, emb_dim), jnp.float32)
    iemb = jax.random.normal(k_i, (B, emb_dim), jnp.float32)
    params_f32 = init_params(k_p, emb_dim=emb_dim, hidden=hidden)
    params_kernel = prepare_params(params_f32)   # one-time bf16 weight cast

    out = content_mlp_forward(uemb, iemb, params_kernel)
    out = jax.block_until_ready(out)
    assert out.shape == (B,)

    # Tight check against a reference that mirrors the kernel's bf16 casts.
    ref_mixed = jax.block_until_ready(
        reference_forward(uemb, iemb, params_f32, mixed_precision=True))
    assert jnp.allclose(out, ref_mixed, atol=1e-3, rtol=1e-3), (
        float(jnp.max(jnp.abs(out - ref_mixed))))

    # Loose check against the exact f32 semantics of the PyTorch module.
    ref_f32 = jax.block_until_ready(
        reference_forward(uemb, iemb, params_f32, mixed_precision=False))
    assert jnp.allclose(out, ref_f32, atol=5e-2), (
        float(jnp.max(jnp.abs(out - ref_f32))))

    print("KERNEL_OK")
</pallas_src>

<mosaic_0001>
module attributes {stable_mosaic.version = 11 : i64} {
  func.func @content_mlp_kernel(%arg0: i32, %arg1: memref<128x384xf32, #tpu.memory_space<vmem>>, %arg2: memref<128x384xf32, #tpu.memory_space<vmem>>, %arg3: memref<384x256xbf16, #tpu.memory_space<vmem>>, %arg4: memref<384x256xbf16, #tpu.memory_space<vmem>>, %arg5: memref<1x256xf32, #tpu.memory_space<vmem>>, %arg6: memref<256x128xbf16, #tpu.memory_space<vmem>>, %arg7: memref<1x128xf32, #tpu.memory_space<vmem>>, %arg8: memref<1x128xf32, #tpu.memory_space<vmem>>, %arg9: memref<1x1xf32, #tpu.memory_space<vmem>>, %arg10: memref<128x1xf32, #tpu.memory_space<vmem>>) attributes {dimension_semantics = [#tpu.dimension_semantics<parallel>], iteration_bounds = array<i64: 8>, scalar_prefetch = 0 : i64, scratch_operands = 0 : i64, tpu.core_type = #tpu.core_type<tc>, window_params = [{transform_indices = @transform_0, window_bounds = array<i64: 128, 384>}, {transform_indices = @transform_1, window_bounds = array<i64: 128, 384>}, {pipeline_mode = #tpu.pipeline_mode<synchronous>, transform_indices = @transform_2, window_bounds = array<i64: 384, 256>}, {pipeline_mode = #tpu.pipeline_mode<synchronous>, transform_indices = @transform_3, window_bounds = array<i64: 384, 256>}, {pipeline_mode = #tpu.pipeline_mode<synchronous>, transform_indices = @transform_4, window_bounds = array<i64: 1, 256>}, {pipeline_mode = #tpu.pipeline_mode<synchronous>, transform_indices = @transform_5, window_bounds = array<i64: 256, 128>}, {pipeline_mode = #tpu.pipeline_mode<synchronous>, transform_indices = @transform_6, window_bounds = array<i64: 1, 128>}, {pipeline_mode = #tpu.pipeline_mode<synchronous>, transform_indices = @transform_7, window_bounds = array<i64: 1, 128>}, {pipeline_mode = #tpu.pipeline_mode<synchronous>, transform_indices = @transform_8, window_bounds = array<i64: 1, 1>}, {transform_indices = @transform_9, window_bounds = array<i64: 128, 1>}]} {
    %c0 = arith.constant 0 : index
    %c0_0 = arith.constant 0 : index
    %0 = vector.load %arg1[%c0, %c0_0] : memref<128x384xf32, #tpu.memory_space<vmem>>, vector<128x384xf32>
    %1 = arith.truncf %0 : vector<128x384xf32> to vector<128x384xbf16>
    %c0_1 = arith.constant 0 : index
    %c0_2 = arith.constant 0 : index
    %2 = vector.load %arg2[%c0_1, %c0_2] : memref<128x384xf32, #tpu.memory_space<vmem>>, vector<128x384xf32>
    %3 = arith.truncf %2 : vector<128x384xf32> to vector<128x384xbf16>
    %c0_3 = arith.constant 0 : index
    %c0_4 = arith.constant 0 : index
    %4 = vector.load %arg3[%c0_3, %c0_4] : memref<384x256xbf16, #tpu.memory_space<vmem>>, vector<384x256xbf16>
    %cst = arith.constant dense<0.000000e+00> : vector<128x256xf32>
    %5 = tpu.matmul %1, %4, %cst {dimension_numbers = #tpu.dot_dimension_numbers<[1], [0], [0], [1], [0, 0, 1, 1], [], []>} : vector<128x384xbf16>, vector<384x256xbf16>, vector<128x256xf32> -> vector<128x256xf32>
    %c0_5 = arith.constant 0 : index
    %c0_6 = arith.constant 0 : index
    %6 = vector.load %arg4[%c0_5, %c0_6] : memref<384x256xbf16, #tpu.memory_space<vmem>>, vector<384x256xbf16>
    %cst_7 = arith.constant dense<0.000000e+00> : vector<128x256xf32>
    %7 = tpu.matmul %3, %6, %cst_7 {dimension_numbers = #tpu.dot_dimension_numbers<[1], [0], [0], [1], [0, 0, 1, 1], [], []>} : vector<128x384xbf16>, vector<384x256xbf16>, vector<128x256xf32> -> vector<128x256xf32>
    %8 = arith.addf %5, %7 : vector<128x256xf32>
    %c0_8 = arith.constant 0 : index
    %c0_9 = arith.constant 0 : index
    %9 = vector.load %arg5[%c0_8, %c0_9] : memref<1x256xf32, #tpu.memory_space<vmem>>, vector<1x256xf32>
    %10 = vector.broadcast %9 : vector<1x256xf32> to vector<128x256xf32>
    %11 = arith.addf %8, %10 : vector<128x256xf32>
    %cst_10 = arith.constant 0.000000e+00 : f32
    %12 = vector.broadcast %cst_10 : f32 to vector<128x256xf32>
    %13 = arith.maximumf %11, %12 : vector<128x256xf32>
    %14 = arith.truncf %13 : vector<128x256xf32> to vector<128x256xbf16>
    %c0_11 = arith.constant 0 : index
    %c0_12 = arith.constant 0 : index
    %15 = vector.load %arg6[%c0_11, %c0_12] : memref<256x128xbf16, #tpu.memory_space<vmem>>, vector<256x128xbf16>
    %cst_13 = arith.constant dense<0.000000e+00> : vector<128x128xf32>
    %16 = tpu.matmul %14, %15, %cst_13 {dimension_numbers = #tpu.dot_dimension_numbers<[1], [0], [0], [1], [0, 0, 1, 1], [], []>} : vector<128x256xbf16>, vector<256x128xbf16>, vector<128x128xf32> -> vector<128x128xf32>
    %c0_14 = arith.constant 0 : index
    %c0_15 = arith.constant 0 : index
    %17 = vector.load %arg7[%c0_14, %c0_15] : memref<1x128xf32, #tpu.memory_space<vmem>>, vector<1x128xf32>
    %18 = vector.broadcast %17 : vector<1x128xf32> to vector<128x128xf32>
    %19 = arith.addf %16, %18 : vector<128x128xf32>
    %cst_16 = arith.constant 0.000000e+00 : f32
    %20 = vector.broadcast %cst_16 : f32 to vector<128x128xf32>
    %21 = arith.maximumf %19, %20 : vector<128x128xf32>
    %c0_17 = arith.constant 0 : index
    %c0_18 = arith.constant 0 : index
    %22 = vector.load %arg8[%c0_17, %c0_18] : memref<1x128xf32, #tpu.memory_space<vmem>>, vector<1x128xf32>
    %23 = vector.broadcast %22 : vector<1x128xf32> to vector<128x128xf32>
    %24 = arith.mulf %21, %23 : vector<128x128xf32>
    %cst_19 = arith.constant dense<0.000000e+00> : vector<128xf32>
    %25 = vector.multi_reduction <add>, %24, %cst_19 [1] : vector<128x128xf32> to vector<128xf32>
    %26 = vector.shape_cast %25 : vector<128xf32> to vector<128x1xf32>
    %c0_20 = arith.constant 0 : index
    %c0_21 = arith.constant 0 : index
    %27 = vector.load %arg9[%c0_20, %c0_21] : memref<1x1xf32, #tpu.memory_space<vmem>>, vector<1x1xf32>
    %28 = vector.broadcast %27 : vector<1x1xf32> to vector<128x1xf32>
    %29 = arith.addf %26, %28 : vector<128x1xf32>
    %30 = arith.negf %29 : vector<128x1xf32>
    %31 = math.exp %30 : vector<128x1xf32>
    %cst_22 = arith.constant 1.000000e+00 : f32
    %32 = vector.broadcast %cst_22 : f32 to vector<128x1xf32>
    %33 = arith.addf %32, %31 : vector<128x1xf32>
    %34 = arith.divf %32, %33 : vector<128x1xf32>
    %c0_23 = arith.constant 0 : index
    %c0_24 = arith.constant 0 : index
    %35 = vector.load %arg10[%c0_23, %c0_24] : memref<128x1xf32, #tpu.memory_space<vmem>>, vector<128x1xf32>
    tpu.vector_store %arg10[%c0_23, %c0_24], %34 {strides = array<i32>} : memref<128x1xf32, #tpu.memory_space<vmem>>, vector<128x1xf32>,
    return
  }
  func.func @transform_0(%arg0: i32) -> (i32, i32) {
    %c0_i32 = arith.constant 0 : i32
    %c0_i32_0 = arith.constant 0 : i32
    return %arg0, %c0_i32 : i32, i32
  }
  func.func @transform_1(%arg0: i32) -> (i32, i32) {
    %c0_i32 = arith.constant 0 : i32
    %c0_i32_0 = arith.constant 0 : i32
    return %arg0, %c0_i32 : i32, i32
  }
  func.func @transform_2(%arg0: i32) -> (i32, i32) {
    %c0_i32 = arith.constant 0 : i32
    %c0_i32_0 = arith.constant 0 : i32
    %c0_i32_1 = arith.constant 0 : i32
    return %c0_i32, %c0_i32_0 : i32, i32
  }
  func.func @transform_3(%arg0: i32) -> (i32, i32) {
    %c0_i32 = arith.constant 0 : i32
    %c0_i32_0 = arith.constant 0 : i32
    %c0_i32_1 = arith.constant 0 : i32
    return %c0_i32, %c0_i32_0 : i32, i32
  }
  func.func @transform_4(%arg0: i32) -> (i32, i32) {
    %c0_i32 = arith.constant 0 : i32
    %c0_i32_0 = arith.constant 0 : i32
    %c0_i32_1 = arith.constant 0 : i32
    return %c0_i32, %c0_i32_0 : i32, i32
  }
  func.func @transform_5(%arg0: i32) -> (i32, i32) {
    %c0_i32 = arith.constant 0 : i32
    %c0_i32_0 = arith.constant 0 : i32
    %c0_i32_1 = arith.constant 0 : i32
    return %c0_i32, %c0_i32_0 : i32, i32
  }
  func.func @transform_6(%arg0: i32) -> (i32, i32) {
    %c0_i32 = arith.constant 0 : i32
    %c0_i32_0 = arith.constant 0 : i32
    %c0_i32_1 = arith.constant 0 : i32
    return %c0_i32, %c0_i32_0 : i32, i32
  }
  func.func @transform_7(%arg0: i32) -> (i32, i32) {
    %c0_i32 = arith.constant 0 : i32
    %c0_i32_0 = arith.constant 0 : i32
    %c0_i32_1 = arith.constant 0 : i32
    return %c0_i32, %c0_i32_0 : i32, i32
  }
  func.func @transform_8(%arg0: i32) -> (i32, i32) {
    %c0_i32 = arith.constant 0 : i32
    %c0_i32_0 = arith.constant 0 : i32
    %c0_i32_1 = arith.constant 0 : i32
    return %c0_i32, %c0_i32_0 : i32, i32
  }
  func.func @transform_9(%arg0: i32) -> (i32, i32) {
    %c0_i32 = arith.constant 0 : i32
    %c0_i32_0 = arith.constant 0 : i32
    return %arg0, %c0_i32 : i32, i32
  }
}

</mosaic_0001>

<llo_original>
// kernel: tpu_custom_call.1
$region0: #{tpu_custom_call.1}
  #allocation0 [shape = 'u32[]', space=smem, size = 0x4, offset = 0x4, fixed_abs, tag = 'smem constant byte address 0x4 - core index']
  #allocation1 [shape = 'u32[72,128]{1,0:T(1,128)}', space=vmem, size = 0x9000, scoped, tag = 'internal scratch']
  #allocation2 [shape = 'f32[1,1]{1,0:T(1,128)S(1)}', space=vmem, size = 0x200, scoped, tag = 'scoped memory for tpu_custom_call.1']
  %s0 = inlined_call_operand.hbm [shape: f32[1000,384], index: 0, kind: input, shape index: {}]
  %s1 = inlined_call_operand.hbm [shape: f32[1000,384], index: 1, kind: input, shape index: {}]
  %s2 = inlined_call_operand.hbm [shape: bf16[384,256], index: 2, kind: input, shape index: {}]
  %s3 = inlined_call_operand.hbm [shape: bf16[384,256], index: 3, kind: input, shape index: {}]
  %s4 = inlined_call_operand.hbm [shape: f32[1,256], index: 4, kind: input, shape index: {}]
  %s5 = inlined_call_operand.hbm [shape: bf16[256,128], index: 5, kind: input, shape index: {}]
  %s6 = inlined_call_operand.hbm [shape: f32[1,128], index: 6, kind: input, shape index: {}]
  %s7 = inlined_call_operand.hbm [shape: f32[1,128], index: 7, kind: input, shape index: {}]
  %s8 = inlined_call_operand.<no memory space> [shape: f32[1,1], index: 8, kind: input, shape index: {}]
  %s9 = inlined_call_operand.vmem [shape: f32[1000,1], index: 9, kind: output, shape index: {}]
  %s10 = sld [smem:[#allocation0]]
  $region149: #{tpu_custom_call.1} parent=0
    _
  %s12 = ssub.s32 1, %s10
  %s13 = scalar_select 0, %s12, %s10
  %v14 = vstv %s8
  %15 = vst [vmem:[#allocation2] sm:$0x1] %v14
  $region1: #{tpu_custom_call.1} parent=0
    #allocation3 [shape = 'u8[393216]{0}', space=vmem, size = 0x60000, scoped, tag = 'input window, operand 0']
    #allocation4 [shape = 's32[2]{0}', space=sflag, size = 0x8, scoped, tag = 'scoped memory for tpu_custom_call.1']
    #allocation5 [shape = 'u8[393216]{0}', space=vmem, size = 0x60000, scoped, tag = 'input window, operand 1']
    #allocation6 [shape = 's32[2]{0}', space=sflag, size = 0x8, scoped, tag = 'scoped memory for tpu_custom_call.1']
    #allocation7 [shape = 'u8[196608]{0}', space=vmem, size = 0x30000, scoped, tag = 'input window, operand 2, single buffered']
    #allocation8 [shape = 'u8[196608]{0}', space=vmem, size = 0x30000, scoped, tag = 'input window, operand 3, single buffered']
    #allocation9 [shape = 's32[1]{0}', space=sflag, size = 0x4, scoped, tag = 'scoped memory for tpu_custom_call.1']
    #allocation10 [shape = 'u8[1024]{0}', space=vmem, size = 0x400, scoped, tag = 'input window, operand 4, single buffered']
    #allocation11 [shape = 'u8[65536]{0}', space=vmem, size = 0x10000, scoped, tag = 'input window, operand 5, single buffered']
    #allocation12 [shape = 's32[1]{0}', space=sflag, size = 0x4, scoped, tag = 'scoped memory for tpu_custom_call.1']
    #allocation13 [shape = 'u8[512]{0}', space=vmem, size = 0x400, scoped, tag = 'input window, operand 6, single buffered']
    #allocation14 [shape = 'u8[512]{0}', space=vmem, size = 0x400, scoped, tag = 'input window, operand 7, single buffered']
    #allocation15 [shape = 's32[1]{0}', space=sflag, size = 0x4, scoped, tag = 'scoped memory for tpu_custom_call.1']
    #allocation16 [shape = 'u8[131072]{0}', space=vmem, size = 0x20000, scoped, tag = 'output window, operand 0']
    %16 = vsyncpa [#allocation4], 0
    %s17 = scalar_lea.sflag [#allocation4], 1
    %18 = vsyncpa %s17, 0
    %19 = vsyncpa [#allocation6], 0
    %s20 = scalar_lea.sflag [#allocation6], 1
    %21 = vsyncpa %s20, 0
    %22 = vsyncpa [#allocation9], 0
    %23 = vsyncpa [#allocation12], 0
    %24 = vsyncpa [#allocation15], 0
    loop: start=0, step=1, limit=10
    $region2: #{tpu_custom_call.1} parent=1 // loop_pre_header
      _
    $region3: #{tpu_custom_call.1} parent=1 // loop_header
      %s26 = sphi 0, %s30
      %p27 = scmp.ge.s32.totalorder %s26, 10
      %s36 = sphi 0, %s38
      %s39 = sphi 0, %s36
      %s40 = sphi 0, %s39
      %s56 = sphi 0, %s40
      %s62 = sphi 0, %s64
      %s65 = sphi 0, %s62
      %s66 = sphi 0, %s65
      %s82 = sphi 0, %s66
      %s86 = sphi 0, %s86
      %s88 = sphi 0, %s86
      %s89 = sphi 0, %s88
      %s103 = sphi 0, %s89
      %s107 = sphi 0, %s107
      %s109 = sphi 0, %s107
      %s110 = sphi 0, %s109
      %s124 = sphi 0, %s110
      %s128 = sphi 0, %s128
      %s130 = sphi 0, %s128
      %s131 = sphi 0, %s130
      %s145 = sphi 0, %s131
      %s149 = sphi 0, %s149
      %s151 = sphi 0, %s149
      %s152 = sphi 0, %s151
      %s166 = sphi 0, %s152
      %s170 = sphi 0, %s170
      %s172 = sphi 0, %s170
      %s173 = sphi 0, %s172
      %s187 = sphi 0, %s173
      %s191 = sphi 0, %s191
      %s193 = sphi 0, %s191
      %s194 = sphi 0, %s193
      %s208 = sphi 0, %s194
      %s212 = sphi 0, %s212
      %s214 = sphi 0, %s212
      %s215 = sphi 0, %s214
      %s229 = sphi 0, %s215
      %s235 = sphi 0, %s237
      %s238 = sphi 0, %s235
      %s239 = sphi 0, %s238
      %s255 = sphi 0, %s239
    $region4: #{tpu_custom_call.1} parent=1 // loop_header_branch
      %29 = sbr.rel (%p27) target = $region8
    $region5: #{tpu_custom_call.1} parent=1 // loop_body
      %s31 = ssub.s32 %s26, 1
      %s32 = ssub.s32 %s26, 2
      %s33 = sadd.s32 %s26, 1
      %s34 = ssub.s32 %s26, %s33
      %p35 = scmp.eq.s32.totalorder %s34, 0
      %s37 = sadd.s32 %s36, 1
      %s38 = scalar_select %p35, %s36, %s37
      %p41 = pneg %p35
      %p42 = scmp.eq.s32.totalorder %s26, 7
      %p43 = por %p41, %p42
      %p44 = scmp.ne.s32.totalorder %s36, %s39
      %p45 = scmp.eq.s32.totalorder %s26, 0
      %p46 = por %p44, %p45
      %p47 = scmp.ne.s32.totalorder %s36, %s39
      %p48 = scmp.eq.s32.totalorder %s31, 7
      %p49 = por %p47, %p48
      %p50 = scmp.ne.s32.totalorder %s39, %s40
      %p51 = scmp.eq.s32.totalorder %s31, 0
      %p52 = por %p50, %p51
      %p53 = scmp.ne.s32.totalorder %s39, %s40
      %p54 = scmp.eq.s32.totalorder %s32, 7
      %p55 = por %p53, %p54
      %p57 = scmp.ne.s32.totalorder %s40, %s56
      %p58 = scmp.eq.s32.totalorder %s32, 0
      %p59 = por %p57, %p58
      %s60 = ssub.s32 %s26, %s33
      %p61 = scmp.eq.s32.totalorder %s60, 0
      %s63 = sadd.s32 %s62, 1
      %s64 = scalar_select %p61, %s62, %s63
      %p67 = pneg %p61
      %p68 = scmp.eq.s32.totalorder %s26, 7
      %p69 = por %p67, %p68
      %p70 = scmp.ne.s32.totalorder %s62, %s65
      %p71 = scmp.eq.s32.totalorder %s26, 0
      %p72 = por %p70, %p71
      %p73 = scmp.ne.s32.totalorder %s62, %s65
      %p74 = scmp.eq.s32.totalorder %s31, 7
      %p75 = por %p73, %p74
      %p76 = scmp.ne.s32.totalorder %s65, %s66
      %p77 = scmp.eq.s32.totalorder %s31, 0
      %p78 = por %p76, %p77
      %p79 = scmp.ne.s32.totalorder %s65, %s66
      %p80 = scmp.eq.s32.totalorder %s32, 7
      %p81 = por %p79, %p80
      %p83 = scmp.ne.s32.totalorder %s66, %s82
      %p84 = scmp.eq.s32.totalorder %s32, 0
      %p85 = por %p83, %p84
      %s87 = sadd.s32 %s86, 1
      %p90 = scmp.eq.s32.totalorder %s26, 7
      %p91 = scmp.ne.s32.totalorder %s86, %s88
      %p92 = scmp.eq.s32.totalorder %s26, 0
      %p93 = por %p91, %p92
      %p94 = scmp.ne.s32.totalorder %s86, %s88
      %p95 = scmp.eq.s32.totalorder %s31, 7
      %p96 = por %p94, %p95
      %p97 = scmp.ne.s32.totalorder %s88, %s89
      %p98 = scmp.eq.s32.totalorder %s31, 0
      %p99 = por %p97, %p98
      %p100 = scmp.ne.s32.totalorder %s88, %s89
      %p101 = scmp.eq.s32.totalorder %s32, 7
      %p102 = por %p100, %p101
      %p104 = scmp.ne.s32.totalorder %s89, %s103
      %p105 = scmp.eq.s32.totalorder %s32, 0
      %p106 = por %p104, %p105
      %s108 = sadd.s32 %s107, 1
      %p111 = scmp.eq.s32.totalorder %s26, 7
      %p112 = scmp.ne.s32.totalorder %s107, %s109
      %p113 = scmp.eq.s32.totalorder %s26, 0
      %p114 = por %p112, %p113
      %p115 = scmp.ne.s32.totalorder %s107, %s109
      %p116 = scmp.eq.s32.totalorder %s31, 7
      %p117 = por %p115, %p116
      %p118 = scmp.ne.s32.totalorder %s109, %s110
      %p119 = scmp.eq.s32.totalorder %s31, 0
      %p120 = por %p118, %p119
      %p121 = scmp.ne.s32.totalorder %s109, %s110
      %p122 = scmp.eq.s32.totalorder %s32, 7
      %p123 = por %p121, %p122
      %p125 = scmp.ne.s32.totalorder %s110, %s124
      %p126 = scmp.eq.s32.totalorder %s32, 0
      %p127 = por %p125, %p126
      %s129 = sadd.s32 %s128, 1
      %p132 = scmp.eq.s32.totalorder %s26, 7
      %p133 = scmp.ne.s32.totalorder %s128, %s130
      %p134 = scmp.eq.s32.totalorder %s26, 0
      %p135 = por %p133, %p134
      %p136 = scmp.ne.s32.totalorder %s128, %s130
      %p137 = scmp.eq.s32.totalorder %s31, 7
      %p138 = por %p136, %p137
      %p139 = scmp.ne.s32.totalorder %s130, %s131
      %p140 = scmp.eq.s32.totalorder %s31, 0
      %p141 = por %p139, %p140
      %p142 = scmp.ne.s32.totalorder %s130, %s131
      %p143 = scmp.eq.s32.totalorder %s32, 7
      %p144 = por %p142, %p143
      %p146 = scmp.ne.s32.totalorder %s131, %s145
      %p147 = scmp.eq.s32.totalorder %s32, 0
      %p148 = por %p146, %p147
      %s150 = sadd.s32 %s149, 1
      %p153 = scmp.eq.s32.totalorder %s26, 7
      %p154 = scmp.ne.s32.totalorder %s149, %s151
      %p155 = scmp.eq.s32.totalorder %s26, 0
      %p156 = por %p154, %p155
      %p157 = scmp.ne.s32.totalorder %s149, %s151
      %p158 = scmp.eq.s32.totalorder %s31, 7
      %p159 = por %p157, %p158
      %p160 = scmp.ne.s32.totalorder %s151, %s152
      %p161 = scmp.eq.s32.totalorder %s31, 0
      %p162 = por %p160, %p161
      %p163 = scmp.ne.s32.totalorder %s151, %s152
      %p164 = scmp.eq.s32.totalorder %s32, 7
      %p165 = por %p163, %p164
      %p167 = scmp.ne.s32.totalorder %s152, %s166
      %p168 = scmp.eq.s32.totalorder %s32, 0
      %p169 = por %p167, %p168
      %s171 = sadd.s32 %s170, 1
      %p174 = scmp.eq.s32.totalorder %s26, 7
      %p175 = scmp.ne.s32.totalorder %s170, %s172
      %p176 = scmp.eq.s32.totalorder %s26, 0
      %p177 = por %p175, %p176
      %p178 = scmp.ne.s32.totalorder %s170, %s172
      %p179 = scmp.eq.s32.totalorder %s31, 7
      %p180 = por %p178, %p179
      %p181 = scmp.ne.s32.totalorder %s172, %s173
      %p182 = scmp.eq.s32.totalorder %s31, 0
      %p183 = por %p181, %p182
      %p184 = scmp.ne.s32.totalorder %s172, %s173
      %p185 = scmp.eq.s32.totalorder %s32, 7
      %p186 = por %p184, %p185
      %p188 = scmp.ne.s32.totalorder %s173, %s187
      %p189 = scmp.eq.s32.totalorder %s32, 0
      %p190 = por %p188, %p189
      %s192 = sadd.s32 %s191, 1
      %p195 = scmp.eq.s32.totalorder %s26, 7
      %p196 = scmp.ne.s32.totalorder %s191, %s193
      %p197 = scmp.eq.s32.totalorder %s26, 0
      %p198 = por %p196, %p197
      %p199 = scmp.ne.s32.totalorder %s191, %s193
      %p200 = scmp.eq.s32.totalorder %s31, 7
      %p201 = por %p199, %p200
      %p202 = scmp.ne.s32.totalorder %s193, %s194
      %p203 = scmp.eq.s32.totalorder %s31, 0
      %p204 = por %p202, %p203
      %p205 = scmp.ne.s32.totalorder %s193, %s194
      %p206 = scmp.eq.s32.totalorder %s32, 7
      %p207 = por %p205, %p206
      %p209 = scmp.ne.s32.totalorder %s194, %s208
      %p210 = scmp.eq.s32.totalorder %s32, 0
      %p211 = por %p209, %p210
      %s213 = sadd.s32 %s212, 1
      %p216 = scmp.eq.s32.totalorder %s26, 7
      %p217 = scmp.ne.s32.totalorder %s212, %s214
      %p218 = scmp.eq.s32.totalorder %s26, 0
      %p219 = por %p217, %p218
      %p220 = scmp.ne.s32.totalorder %s212, %s214
      %p221 = scmp.eq.s32.totalorder %s31, 7
      %p222 = por %p220, %p221
      %p223 = scmp.ne.s32.totalorder %s214, %s215
      %p224 = scmp.eq.s32.totalorder %s31, 0
      %p225 = por %p223, %p224
      %p226 = scmp.ne.s32.totalorder %s214, %s215
      %p227 = scmp.eq.s32.totalorder %s32, 7
      %p228 = por %p226, %p227
      %p230 = scmp.ne.s32.totalorder %s215, %s229
      %p231 = scmp.eq.s32.totalorder %s32, 0
      %p232 = por %p230, %p231
      %s233 = ssub.s32 %s26, %s33
      %p234 = scmp.eq.s32.totalorder %s233, 0
      %s236 = sadd.s32 %s235, 1
      %s237 = scalar_select %p234, %s235, %s236
      %p240 = pneg %p234
      %p241 = scmp.eq.s32.totalorder %s26, 7
      %p242 = por %p240, %p241
      %p243 = scmp.ne.s32.totalorder %s235, %s238
      %p244 = scmp.eq.s32.totalorder %s26, 0
      %p245 = por %p243, %p244
      %p246 = scmp.ne.s32.totalorder %s235, %s238
      %p247 = scmp.eq.s32.totalorder %s31, 7
      %p248 = por %p246, %p247
      %p249 = scmp.ne.s32.totalorder %s238, %s239
      %p250 = scmp.eq.s32.totalorder %s31, 0
      %p251 = por %p249, %p250
      %p252 = scmp.ne.s32.totalorder %s238, %s239
      %p253 = scmp.eq.s32.totalorder %s32, 7
      %p254 = por %p252, %p253
      %p256 = scmp.ne.s32.totalorder %s239, %s255
      %p257 = scmp.eq.s32.totalorder %s32, 0
      %p258 = por %p256, %p257
      %p259 = scmp.le.s32.totalorder 1, %s26
      %p260 = scmp.lt.s32.totalorder %s26, 9
      %p261 = pnand %p259, %p260
      %p262 = pneg %p261
      // Predicated region
      $region9: #{tpu_custom_call.1} parent=5 // pred_check
        _
      $region10: #{tpu_custom_call.1} parent=5 // pred_check_branch
        %264 = sbr.rel (%p261) target = $region12
      $region11: #{tpu_custom_call.1} parent=5 // pred_region
        %s265 = ssub.s32 %s26, 1
        // Predicated region
        $region13: #{tpu_custom_call.1} parent=11 // pred_check
          %p266 = pneg %p99
        $region14: #{tpu_custom_call.1} parent=11 // pred_check_branch
          %268 = sbr.rel (%p266) target = $region16
        $region15: #{tpu_custom_call.1} parent=11 // pred_region
          %270 = vsyncadd [#allocation6], 0
          %s271 = sshll.u32 %s2, 4
          %s272 = int_to_ptr.hbm [resolvable:$true] %s271
          %s273 = sshll.u32 [#allocation7], 4
          %s274 = int_to_ptr.vmem [resolvable:$true] %s273
          %279 = dma.hbm_to_vmem [thread:$0]  %s272, 6144, %s274, [#allocation6], 128, 128, 8
        $region16: #{tpu_custom_call.1} parent=11 // pred_fallthru
          _
        // Predicated region
        $region17: #{tpu_custom_call.1} parent=11 // pred_check
          %p280 = pneg %p120
        $region18: #{tpu_custom_call.1} parent=11 // pred_check_branch
          %282 = sbr.rel (%p280) target = $region20
        $region19: #{tpu_custom_call.1} parent=11 // pred_region
          %284 = vsyncadd [#allocation9], 0
          %s285 = sshll.u32 %s3, 4
          %s286 = int_to_ptr.hbm [resolvable:$true] %s285
          %s287 = sshll.u32 [#allocation8], 4
          %s288 = int_to_ptr.vmem [resolvable:$true] %s287
          %293 = dma.hbm_to_vmem [thread:$0]  %s286, 6144, %s288, [#allocation9], 128, 128, 8
        $region20: #{tpu_custom_call.1} parent=11 // pred_fallthru
          _
        // Predicated region
        $region21: #{tpu_custom_call.1} parent=11 // pred_check
          %p294 = pneg %p141
        $region22: #{tpu_custom_call.1} parent=11 // pred_check_branch
          %296 = sbr.rel (%p294) target = $region24
        $region23: #{tpu_custom_call.1} parent=11 // pred_region
          %298 = vsyncadd [#allocation9], 0
          %s300 = sshll.u32 %s4, 4
          %s301 = int_to_ptr.hbm [resolvable:$true] %s300
          %s302 = sshll.u32 [#allocation10], 4
          %s303 = int_to_ptr.vmem [resolvable:$true] %s302
          %305 = dma.hbm_to_vmem [thread:$0]  %s301, 32, %s303, [#allocation9]
        $region24: #{tpu_custom_call.1} parent=11 // pred_fallthru
          _
        // Predicated region
        $region25: #{tpu_custom_call.1} parent=11 // pred_check
          %p306 = pneg %p162
        $region26: #{tpu_custom_call.1} parent=11 // pred_check_branch
          %308 = sbr.rel (%p306) target = $region28
        $region27: #{tpu_custom_call.1} parent=11 // pred_region
          %310 = vsyncadd [#allocation12], 0
          %s311 = sshll.u32 %s5, 4
          %s312 = int_to_ptr.hbm [resolvable:$true] %s311
          %s313 = sshll.u32 [#allocation11], 4
          %s314 = int_to_ptr.vmem [resolvable:$true] %s313
          %319 = dma.hbm_to_vmem [thread:$0]  %s312, 2048, %s314, [#allocation12], 64, 64, 4
        $region28: #{tpu_custom_call.1} parent=11 // pred_fallthru
          _
        // Predicated region
        $region29: #{tpu_custom_call.1} parent=11 // pred_check
          %p320 = pneg %p183
        $region30: #{tpu_custom_call.1} parent=11 // pred_check_branch
          %322 = sbr.rel (%p320) target = $region32
        $region31: #{tpu_custom_call.1} parent=11 // pred_region
          %324 = vsyncadd [#allocation12], 0
          %s326 = sshll.u32 %s6, 4
          %s327 = int_to_ptr.hbm [resolvable:$true] %s326
          %s328 = sshll.u32 [#allocation13], 4
          %s329 = int_to_ptr.vmem [resolvable:$true] %s328
          %331 = dma.hbm_to_vmem [thread:$0]  %s327, 16, %s329, [#allocation12]
        $region32: #{tpu_custom_call.1} parent=11 // pred_fallthru
          _
        // Predicated region
        $region33: #{tpu_custom_call.1} parent=11 // pred_check
          %p332 = pneg %p204
        $region34: #{tpu_custom_call.1} parent=11 // pred_check_branch
          %334 = sbr.rel (%p332) target = $region36
        $region35: #{tpu_custom_call.1} parent=11 // pred_region
          %336 = vsyncadd [#allocation15], 0
          %s338 = sshll.u32 %s7, 4
          %s339 = int_to_ptr.hbm [resolvable:$true] %s338
          %s340 = sshll.u32 [#allocation14], 4
          %s341 = int_to_ptr.vmem [resolvable:$true] %s340
          %343 = dma.hbm_to_vmem [thread:$0]  %s339, 16, %s341, [#allocation15]
        $region36: #{tpu_custom_call.1} parent=11 // pred_fallthru
          _
        // Predicated region
        $region37: #{tpu_custom_call.1} parent=11 // pred_check
          %p344 = pneg %p225
        $region38: #{tpu_custom_call.1} parent=11 // pred_check_branch
          %346 = sbr.rel (%p344) target = $region40
        $region39: #{tpu_custom_call.1} parent=11 // pred_region
          _
        $region40: #{tpu_custom_call.1} parent=11 // pred_fallthru
          _
      $region12: #{tpu_custom_call.1} parent=5 // pred_fallthru
        _
      %p347 = scmp.lt.s32.totalorder %s26, 8
      // Predicated region
      $region41: #{tpu_custom_call.1} parent=5 // pred_check
        %p348 = pneg %p347
      $region42: #{tpu_custom_call.1} parent=5 // pred_check_branch
        %350 = sbr.rel (%p348) target = $region44
      $region43: #{tpu_custom_call.1} parent=5 // pred_region
        // Predicated region
        $region45: #{tpu_custom_call.1} parent=43 // pred_check
          %p351 = pneg %p46
        $region46: #{tpu_custom_call.1} parent=43 // pred_check_branch
          %353 = sbr.rel (%p351) target = $region48
        $region47: #{tpu_custom_call.1} parent=43 // pred_region
          %s354 = sand.u32 %s36, 1
          %s355 = scalar_lea.sflag [#allocation4], %s354
          %s356 = sand.u32 %s36, 1
          %s357 = smul.addr %s356, 384
          %s358 = scalar_lea.vmem [#allocation3], %s357
          %s359 = smul.u32 16, %s26
          %s360 = ssub.s32 125, %s359
          %p361 = scmp.lt.s32.totalorder %s360, 16
          %s362 = scalar_select %p361, %s360, 16
          %s363 = smul.u32 8, %s362
          %s364 = smul.u32 %s363, 3
          %s365 = ssub.s32 384, %s364
          %s366 = sshll.u32 %s365, 4
          %367 = vsyncadd %s355, %s366
          %p368 = scmp.ne.s32.totalorder 0, %s364
          %s369 = smul.addr %s359, 3
          %s370 = smul.addr %s369, 8
          %s371 = scalar_lea.hbm %s0, %s370
          %s372 = smul.u32 24, %s362
          %s373 = sshll.u32 %s371, 4
          %s374 = int_to_ptr.hbm [resolvable:$true] %s373
          %s375 = sshll.u32 %s358, 4
          %s376 = int_to_ptr.vmem [resolvable:$true] %s375
          %s377 = sshll.u32 %s372, 4
          %381 = dma.hbm_to_vmem [thread:$0]  (%p368), %s374, %s377, %s376, %s355, 384, 384, 24
        $region48: #{tpu_custom_call.1} parent=43 // pred_fallthru
          _
        // Predicated region
        $region49: #{tpu_custom_call.1} parent=43 // pred_check
          %p382 = pneg %p72
        $region50: #{tpu_custom_call.1} parent=43 // pred_check_branch
          %384 = sbr.rel (%p382) target = $region52
        $region51: #{tpu_custom_call.1} parent=43 // pred_region
          %s385 = sand.u32 %s26, 1
          %s386 = scalar_lea.sflag [#allocation6], %s385
          %s387 = sand.u32 %s62, 1
          %s388 = smul.addr %s387, 384
          %s389 = scalar_lea.vmem [#allocation5], %s388
          %s390 = smul.u32 16, %s26
          %s391 = ssub.s32 125, %s390
          %p392 = scmp.lt.s32.totalorder %s391, 16
          %s393 = scalar_select %p392, %s391, 16
          %s394 = smul.u32 8, %s393
          %s395 = smul.u32 %s394, 3
          %s396 = ssub.s32 384, %s395
          %s397 = sshll.u32 %s396, 4
          %398 = vsyncadd %s386, %s397
          %p399 = scmp.ne.s32.totalorder 0, %s395
          %s400 = smul.addr %s390, 3
          %s401 = smul.addr %s400, 8
          %s402 = scalar_lea.hbm %s1, %s401
          %s403 = smul.u32 24, %s393
          %s404 = sshll.u32 %s402, 4
          %s405 = int_to_ptr.hbm [resolvable:$true] %s404
          %s406 = sshll.u32 %s389, 4
          %s407 = int_to_ptr.vmem [resolvable:$true] %s406
          %s408 = sshll.u32 %s403, 4
          %412 = dma.hbm_to_vmem [thread:$0]  (%p399), %s405, %s408, %s407, %s386, 384, 384, 24
        $region52: #{tpu_custom_call.1} parent=43 // pred_fallthru
          _
      $region44: #{tpu_custom_call.1} parent=5 // pred_fallthru
        _
      %p413 = scmp.le.s32.totalorder 1, %s26
      %p414 = scmp.lt.s32.totalorder %s26, 9
      %p415 = pnand %p413, %p414
      %p416 = pneg %p415
      // Predicated region
      $region53: #{tpu_custom_call.1} parent=5 // pred_check
        _
      $region54: #{tpu_custom_call.1} parent=5 // pred_check_branch
        %418 = sbr.rel (%p415) target = $region56
      $region55: #{tpu_custom_call.1} parent=5 // pred_region
        %s419 = ssub.s32 %s26, 1
        %s420 = sand.u32 %s39, 1
        %s421 = scalar_lea.sflag [#allocation4], %s420
        %s422 = sand.u32 %s39, 1
        %s423 = smul.addr %s422, 384
        %s424 = scalar_lea.vmem [#allocation3], %s423
        // Predicated region
        $region57: #{tpu_custom_call.1} parent=55 // pred_check
          %p425 = pneg %p52
        $region58: #{tpu_custom_call.1} parent=55 // pred_check_branch
          %427 = sbr.rel (%p425) target = $region60
        $region59: #{tpu_custom_call.1} parent=55 // pred_region
          %429 = dma.done %s421, 6144
        $region60: #{tpu_custom_call.1} parent=55 // pred_fallthru
          _
        %s430 = sand.u32 %s31, 1
        %s431 = scalar_lea.sflag [#allocation6], %s430
        %s432 = sand.u32 %s65, 1
        %s433 = smul.addr %s432, 384
        %s434 = scalar_lea.vmem [#allocation5], %s433
        // Predicated region
        $region61: #{tpu_custom_call.1} parent=55 // pred_check
          %p435 = pneg %p78
        $region62: #{tpu_custom_call.1} parent=55 // pred_check_branch
          %437 = sbr.rel (%p435) target = $region64
        $region63: #{tpu_custom_call.1} parent=55 // pred_region
          %439 = dma.done %s431, 6144
        $region64: #{tpu_custom_call.1} parent=55 // pred_fallthru
          _
        // Predicated region
        $region65: #{tpu_custom_call.1} parent=55 // pred_check
          %p440 = pneg %p99
        $region66: #{tpu_custom_call.1} parent=55 // pred_check_branch
          %442 = sbr.rel (%p440) target = $region68
        $region67: #{tpu_custom_call.1} parent=55 // pred_region
          %444 = dma.done [#allocation6], 6144
        $region68: #{tpu_custom_call.1} parent=55 // pred_fallthru
          _
        // Predicated region
        $region69: #{tpu_custom_call.1} parent=55 // pred_check
          %p445 = pneg %p120
        $region70: #{tpu_custom_call.1} parent=55 // pred_check_branch
          %447 = sbr.rel (%p445) target = $region72
        $region71: #{tpu_custom_call.1} parent=55 // pred_region
          %449 = dma.done [#allocation9], 6144
        $region72: #{tpu_custom_call.1} parent=55 // pred_fallthru
          _
        // Predicated region
        $region73: #{tpu_custom_call.1} parent=55 // pred_check
          %p450 = pneg %p141
        $region74: #{tpu_custom_call.1} parent=55 // pred_check_branch
          %452 = sbr.rel (%p450) target = $region76
        $region75: #{tpu_custom_call.1} parent=55 // pred_region
          %454 = dma.done [#allocation9], 32
        $region76: #{tpu_custom_call.1} parent=55 // pred_fallthru
          _
        // Predicated region
        $region77: #{tpu_custom_call.1} parent=55 // pred_check
          %p455 = pneg %p162
        $region78: #{tpu_custom_call.1} parent=55 // pred_check_branch
          %457 = sbr.rel (%p455) target = $region80
        $region79: #{tpu_custom_call.1} parent=55 // pred_region
          %459 = dma.done [#allocation12], 2048
        $region80: #{tpu_custom_call.1} parent=55 // pred_fallthru
          _
        // Predicated region
        $region81: #{tpu_custom_call.1} parent=55 // pred_check
          %p460 = pneg %p183
        $region82: #{tpu_custom_call.1} parent=55 // pred_check_branch
          %462 = sbr.rel (%p460) target = $region84
        $region83: #{tpu_custom_call.1} parent=55 // pred_region
          %464 = dma.done [#allocation12], 16
        $region84: #{tpu_custom_call.1} parent=55 // pred_fallthru
          _
        // Predicated region
        $region85: #{tpu_custom_call.1} parent=55 // pred_check
          %p465 = pneg %p204
        $region86: #{tpu_custom_call.1} parent=55 // pred_check_branch
          %467 = sbr.rel (%p465) target = $region88
        $region87: #{tpu_custom_call.1} parent=55 // pred_region
          %469 = dma.done [#allocation15], 16
        $region88: #{tpu_custom_call.1} parent=55 // pred_fallthru
          _
        %s470 = sand.u32 %s39, 1
        %s471 = scalar_lea.sflag [#allocation4], %s470
        %s472 = sand.u32 %s39, 1
        %s473 = smul.addr %s472, 384
        %s474 = scalar_lea.vmem [#allocation3], %s473
        %p475 = pneg %p52
        %p476 = pneg %p49
        %s477 = sand.u32 %s31, 1
        %s478 = scalar_lea.sflag [#allocation6], %s477
        %s479 = sand.u32 %s65, 1
        %s480 = smul.addr %s479, 384
        %s481 = scalar_lea.vmem [#allocation5], %s480
        %p482 = pneg %p78
        %p483 = pneg %p75
        %p484 = pneg %p99
        %p485 = pneg %p96
        %p486 = pneg %p120
        %p487 = pneg %p117
        %p488 = pneg %p141
        %p489 = pneg %p138
        %p490 = pneg %p162
        %p491 = pneg %p159
        %p492 = pneg %p183
        %p493 = pneg %p180
        %p494 = pneg %p204
        %p495 = pneg %p201
        %p496 = pneg %p225
        %p497 = pneg %p222
        %p498 = pneg %p251
        %p499 = pneg %p248
        %s500 = sand.u32 %s238, 1
        %s501 = sand.u32 %s238, 1
        %s502 = smul.addr %s501, 128
        %s503 = scalar_lea.vmem [#allocation16], %s502
        %s504 = smul.u32 16, %s31
        %s505 = ssub.s32 125, %s504
        %p506 = scmp.lt.s32.totalorder %s505, 16
        %s507 = scalar_select %p506, %s505, 16
        %s508 = smul.u32 8, %s507
        %s509 = smul.u32 %s508, 3
        %s510 = smul.u32 16, %s31
        %s511 = ssub.s32 125, %s510
        %p512 = scmp.lt.s32.totalorder %s511, 16
        %s513 = scalar_select %p512, %s511, 16
        %s514 = smul.u32 8, %s513
        %s515 = smul.u32 %s514, 3
        %s516 = smul.u32 16, %s31
        %s517 = ssub.s32 125, %s516
        %p518 = scmp.lt.s32.totalorder %s517, 16
        %s519 = scalar_select %p518, %s517, 16
        %s520 = smul.u32 8, %s519
        %v521 = vld [vmem:[%s424] sm:$0xff]
        %v522 = vld [vmem:[%s424 + $0x8] sm:$0xff]
        %v523 = vld [vmem:[%s424 + $0x10] sm:$0xff]
        %v524 = vld [vmem:[%s424 + $0x18] sm:$0xff]
        %v525 = vld [vmem:[%s424 + $0x20] sm:$0xff]
        %v526 = vld [vmem:[%s424 + $0x28] sm:$0xff]
        %v527 = vld [vmem:[%s424 + $0x30] sm:$0xff]
        %v528 = vld [vmem:[%s424 + $0x38] sm:$0xff]
        %v529 = vld [vmem:[%s424 + $0x40] sm:$0xff]
        %v530 = vld [vmem:[%s424 + $0x48] sm:$0xff]
        %v531 = vld [vmem:[%s424 + $0x50] sm:$0xff]
        %v532 = vld [vmem:[%s424 + $0x58] sm:$0xff]
        %v533 = vld [vmem:[%s424 + $0x60] sm:$0xff]
        %v534 = vld [vmem:[%s424 + $0x68] sm:$0xff]
        %v535 = vld [vmem:[%s424 + $0x70] sm:$0xff]
        %v536 = vld [vmem:[%s424 + $0x78] sm:$0xff]
        %v537 = vld [vmem:[%s424 + $0x80] sm:$0xff]
        %v538 = vld [vmem:[%s424 + $0x88] sm:$0xff]
        %v539 = vld [vmem:[%s424 + $0x90] sm:$0xff]
        %v540 = vld [vmem:[%s424 + $0x98] sm:$0xff]
        %v541 = vld [vmem:[%s424 + $0xa0] sm:$0xff]
        %v542 = vld [vmem:[%s424 + $0xa8] sm:$0xff]
        %v543 = vld [vmem:[%s424 + $0xb0] sm:$0xff]
        %v544 = vld [vmem:[%s424 + $0xb8] sm:$0xff]
        %v545 = vld [vmem:[%s424 + $0xc0] sm:$0xff]
        %v546 = vld [vmem:[%s424 + $0xc8] sm:$0xff]
        %v547 = vld [vmem:[%s424 + $0xd0] sm:$0xff]
        %v548 = vld [vmem:[%s424 + $0xd8] sm:$0xff]
        %v549 = vld [vmem:[%s424 + $0xe0] sm:$0xff]
        %v550 = vld [vmem:[%s424 + $0xe8] sm:$0xff]
        %v551 = vld [vmem:[%s424 + $0xf0] sm:$0xff]
        %v552 = vld [vmem:[%s424 + $0xf8] sm:$0xff]
        %v553 = vld [vmem:[%s424 + $0x100] sm:$0xff]
        %v554 = vld [vmem:[%s424 + $0x108] sm:$0xff]
        %v555 = vld [vmem:[%s424 + $0x110] sm:$0xff]
        %v556 = vld [vmem:[%s424 + $0x118] sm:$0xff]
        %v557 = vld [vmem:[%s424 + $0x120] sm:$0xff]
        %v558 = vld [vmem:[%s424 + $0x128] sm:$0xff]
        %v559 = vld [vmem:[%s424 + $0x130] sm:$0xff]
        %v560 = vld [vmem:[%s424 + $0x138] sm:$0xff]
        %v561 = vld [vmem:[%s424 + $0x140] sm:$0xff]
        %v562 = vld [vmem:[%s424 + $0x148] sm:$0xff]
        %v563 = vld [vmem:[%s424 + $0x150] sm:$0xff]
        %v564 = vld [vmem:[%s424 + $0x158] sm:$0xff]
        %v565 = vld [vmem:[%s424 + $0x160] sm:$0xff]
        %v566 = vld [vmem:[%s424 + $0x168] sm:$0xff]
        %v567 = vld [vmem:[%s424 + $0x170] sm:$0xff]
        %v568 = vld [vmem:[%s424 + $0x178] sm:$0xff]
        %v569 = vpack.c.bf16 %v524, %v521
        %v570 = vpack.c.bf16 %v525, %v522
        %v571 = vpack.c.bf16 %v526, %v523
        %v572 = vpack.c.bf16 %v530, %v527
        %v573 = vpack.c.bf16 %v531, %v528
        %v574 = vpack.c.bf16 %v532, %v529
        %v575 = vpack.c.bf16 %v536, %v533
        %v576 = vpack.c.bf16 %v537, %v534
        %v577 = vpack.c.bf16 %v538, %v535
        %v578 = vpack.c.bf16 %v542, %v539
        %v579 = vpack.c.bf16 %v543, %v540
        %v580 = vpack.c.bf16 %v544, %v541
        %v581 = vpack.c.bf16 %v548, %v545
        %v582 = vpack.c.bf16 %v549, %v546
        %v583 = vpack.c.bf16 %v550, %v547
        %v584 = vpack.c.bf16 %v554, %v551
        %v585 = vpack.c.bf16 %v555, %v552
        %v586 = vpack.c.bf16 %v556, %v553
        %v587 = vpack.c.bf16 %v560, %v557
        %v588 = vpack.c.bf16 %v561, %v558
        %v589 = vpack.c.bf16 %v562, %v559
        %v590 = vpack.c.bf16 %v566, %v563
        %v591 = vpack.c.bf16 %v567, %v564
        %v592 = vpack.c.bf16 %v568, %v565
        %v593 = vld [vmem:[%s434] sm:$0xff]
        %v594 = vld [vmem:[%s434 + $0x8] sm:$0xff]
        %v595 = vld [vmem:[%s434 + $0x10] sm:$0xff]
        %v596 = vld [vmem:[%s434 + $0x18] sm:$0xff]
        %v597 = vld [vmem:[%s434 + $0x20] sm:$0xff]
        %v598 = vld [vmem:[%s434 + $0x28] sm:$0xff]
        %v599 = vld [vmem:[%s434 + $0x30] sm:$0xff]
        %v600 = vld [vmem:[%s434 + $0x38] sm:$0xff]
        %v601 = vld [vmem:[%s434 + $0x40] sm:$0xff]
        %v602 = vld [vmem:[%s434 + $0x48] sm:$0xff]
        %v603 = vld [vmem:[%s434 + $0x50] sm:$0xff]
        %v604 = vld [vmem:[%s434 + $0x58] sm:$0xff]
        %v605 = vld [vmem:[%s434 + $0x60] sm:$0xff]
        %v606 = vld [vmem:[%s434 + $0x68] sm:$0xff]
        %v607 = vld [vmem:[%s434 + $0x70] sm:$0xff]
        %v608 = vld [vmem:[%s434 + $0x78] sm:$0xff]
        %v609 = vld [vmem:[%s434 + $0x80] sm:$0xff]
        %v610 = vld [vmem:[%s434 + $0x88] sm:$0xff]
        %v611 = vld [vmem:[%s434 + $0x90] sm:$0xff]
        %v612 = vld [vmem:[%s434 + $0x98] sm:$0xff]
        %v613 = vld [vmem:[%s434 + $0xa0] sm:$0xff]
        %v614 = vld [vmem:[%s434 + $0xa8] sm:$0xff]
        %v615 = vld [vmem:[%s434 + $0xb0] sm:$0xff]
        %v616 = vld [vmem:[%s434 + $0xb8] sm:$0xff]
        %v617 = vld [vmem:[%s434 + $0xc0] sm:$0xff]
        %v618 = vld [vmem:[%s434 + $0xc8] sm:$0xff]
        %v619 = vld [vmem:[%s434 + $0xd0] sm:$0xff]
        %v620 = vld [vmem:[%s434 + $0xd8] sm:$0xff]
        %v621 = vld [vmem:[%s434 + $0xe0] sm:$0xff]
        %v622 = vld [vmem:[%s434 + $0xe8] sm:$0xff]
        %v623 = vld [vmem:[%s434 + $0xf0] sm:$0xff]
        %v624 = vld [vmem:[%s434 + $0xf8] sm:$0xff]
        %v625 = vld [vmem:[%s434 + $0x100] sm:$0xff]
        %v626 = vld [vmem:[%s434 + $0x108] sm:$0xff]
        %v627 = vld [vmem:[%s434 + $0x110] sm:$0xff]
        %v628 = vld [vmem:[%s434 + $0x118] sm:$0xff]
        %v629 = vld [vmem:[%s434 + $0x120] sm:$0xff]
        %v630 = vld [vmem:[%s434 + $0x128] sm:$0xff]
        %v631 = vld [vmem:[%s434 + $0x130] sm:$0xff]
        %v632 = vld [vmem:[%s434 + $0x138] sm:$0xff]
        %v633 = vld [vmem:[%s434 + $0x140] sm:$0xff]
        %v634 = vld [vmem:[%s434 + $0x148] sm:$0xff]
        %v635 = vld [vmem:[%s434 + $0x150] sm:$0xff]
        %v636 = vld [vmem:[%s434 + $0x158] sm:$0xff]
        %v637 = vld [vmem:[%s434 + $0x160] sm:$0xff]
        %v638 = vld [vmem:[%s434 + $0x168] sm:$0xff]
        %v639 = vld [vmem:[%s434 + $0x170] sm:$0xff]
        %v640 = vld [vmem:[%s434 + $0x178] sm:$0xff]
        %v641 = vpack.c.bf16 %v596, %v593
        %v642 = vpack.c.bf16 %v597, %v594
        %v643 = vpack.c.bf16 %v598, %v595
        %v644 = vpack.c.bf16 %v602, %v599
        %v645 = vpack.c.bf16 %v603, %v600
        %v646 = vpack.c.bf16 %v604, %v601
        %v647 = vpack.c.bf16 %v608, %v605
        %v648 = vpack.c.bf16 %v609, %v606
        %v649 = vpack.c.bf16 %v610, %v607
        %v650 = vpack.c.bf16 %v614, %v611
        %v651 = vpack.c.bf16 %v615, %v612
        %v652 = vpack.c.bf16 %v616, %v613
        %v653 = vpack.c.bf16 %v620, %v617
        %v654 = vpack.c.bf16 %v621, %v618
        %v655 = vpack.c.bf16 %v622, %v619
        %v656 = vpack.c.bf16 %v626, %v623
        %v657 = vpack.c.bf16 %v627, %v624
        %v658 = vpack.c.bf16 %v628, %v625
        %v659 = vpack.c.bf16 %v632, %v629
        %v660 = vpack.c.bf16 %v633, %v630
        %v661 = vpack.c.bf16 %v634, %v631
        %v662 = vpack.c.bf16 %v638, %v635
        %v663 = vpack.c.bf16 %v639, %v636
        %v664 = vpack.c.bf16 %v640, %v637
        %v665 = vld [vmem:[#allocation7] sm:$0xff]
        %v666 = vld [vmem:[#allocation7 + $0x8] sm:$0xff]
        %v667 = vld [vmem:[#allocation7 + $0x10] sm:$0xff]
        %v668 = vld [vmem:[#allocation7 + $0x18] sm:$0xff]
        %v669 = vld [vmem:[#allocation7 + $0x20] sm:$0xff]
        %v670 = vld [vmem:[#allocation7 + $0x28] sm:$0xff]
        %v671 = vld [vmem:[#allocation7 + $0x30] sm:$0xff]
        %v672 = vld [vmem:[#allocation7 + $0x38] sm:$0xff]
        %v673 = vld [vmem:[#allocation7 + $0x40] sm:$0xff]
        %v674 = vld [vmem:[#allocation7 + $0x48] sm:$0xff]
        %v675 = vld [vmem:[#allocation7 + $0x50] sm:$0xff]
        %v676 = vld [vmem:[#allocation7 + $0x58] sm:$0xff]
        %v677 = vld [vmem:[#allocation7 + $0x60] sm:$0xff]
        %v678 = vld [vmem:[#allocation7 + $0x68] sm:$0xff]
        %v679 = vld [vmem:[#allocation7 + $0x70] sm:$0xff]
        %v680 = vld [vmem:[#allocation7 + $0x78] sm:$0xff]
        %v681 = vld [vmem:[#allocation7 + $0x80] sm:$0xff]
        %v682 = vld [vmem:[#allocation7 + $0x88] sm:$0xff]
        %v683 = vld [vmem:[#allocation7 + $0x90] sm:$0xff]
        %v684 = vld [vmem:[#allocation7 + $0x98] sm:$0xff]
        %v685 = vld [vmem:[#allocation7 + $0xa0] sm:$0xff]
        %v686 = vld [vmem:[#allocation7 + $0xa8] sm:$0xff]
        %v687 = vld [vmem:[#allocation7 + $0xb0] sm:$0xff]
        %v688 = vld [vmem:[#allocation7 + $0xb8] sm:$0xff]
        %v689 = vld [vmem:[#allocation7 + $0xc0] sm:$0xff]
        %v690 = vld [vmem:[#allocation7 + $0xc8] sm:$0xff]
        %v691 = vld [vmem:[#allocation7 + $0xd0] sm:$0xff]
        %v692 = vld [vmem:[#allocation7 + $0xd8] sm:$0xff]
        %v693 = vld [vmem:[#allocation7 + $0xe0] sm:$0xff]
        %v694 = vld [vmem:[#allocation7 + $0xe8] sm:$0xff]
        %v695 = vld [vmem:[#allocation7 + $0xf0] sm:$0xff]
        %v696 = vld [vmem:[#allocation7 + $0xf8] sm:$0xff]
        %v697 = vld [vmem:[#allocation7 + $0x100] sm:$0xff]
        %v698 = vld [vmem:[#allocation7 + $0x108] sm:$0xff]
        %v699 = vld [vmem:[#allocation7 + $0x110] sm:$0xff]
        %v700 = vld [vmem:[#allocation7 + $0x118] sm:$0xff]
        %v701 = vld [vmem:[#allocation7 + $0x120] sm:$0xff]
        %v702 = vld [vmem:[#allocation7 + $0x128] sm:$0xff]
        %v703 = vld [vmem:[#allocation7 + $0x130] sm:$0xff]
        %v704 = vld [vmem:[#allocation7 + $0x138] sm:$0xff]
        %v705 = vld [vmem:[#allocation7 + $0x140] sm:$0xff]
        %v706 = vld [vmem:[#allocation7 + $0x148] sm:$0xff]
        %v707 = vld [vmem:[#allocation7 + $0x150] sm:$0xff]
        %v708 = vld [vmem:[#allocation7 + $0x158] sm:$0xff]
        %v709 = vld [vmem:[#allocation7 + $0x160] sm:$0xff]
        %v710 = vld [vmem:[#allocation7 + $0x168] sm:$0xff]
        %v711 = vld [vmem:[#allocation7 + $0x170] sm:$0xff]
        %v712 = vld [vmem:[#allocation7 + $0x178] sm:$0xff]
        %v713 = vld [vmem:[#allocation8] sm:$0xff]
        %v714 = vld [vmem:[#allocation8 + $0x8] sm:$0xff]
        %v715 = vld [vmem:[#allocation8 + $0x10] sm:$0xff]
        %v716 = vld [vmem:[#allocation8 + $0x18] sm:$0xff]
        %v717 = vld [vmem:[#allocation8 + $0x20] sm:$0xff]
        %v718 = vld [vmem:[#allocation8 + $0x28] sm:$0xff]
        %v719 = vld [vmem:[#allocation8 + $0x30] sm:$0xff]
        %v720 = vld [vmem:[#allocation8 + $0x38] sm:$0xff]
        %v721 = vld [vmem:[#allocation8 + $0x40] sm:$0xff]
        %v722 = vld [vmem:[#allocation8 + $0x48] sm:$0xff]
        %v723 = vld [vmem:[#allocation8 + $0x50] sm:$0xff]
        %v724 = vld [vmem:[#allocation8 + $0x58] sm:$0xff]
        %v725 = vld [vmem:[#allocation8 + $0x60] sm:$0xff]
        %v726 = vld [vmem:[#allocation8 + $0x68] sm:$0xff]
        %v727 = vld [vmem:[#allocation8 + $0x70] sm:$0xff]
        %v728 = vld [vmem:[#allocation8 + $0x78] sm:$0xff]
        %v729 = vld [vmem:[#allocation8 + $0x80] sm:$0xff]
        %v730 = vld [vmem:[#allocation8 + $0x88] sm:$0xff]
        %v731 = vld [vmem:[#allocation8 + $0x90] sm:$0xff]
        %v732 = vld [vmem:[#allocation8 + $0x98] sm:$0xff]
        %v733 = vld [vmem:[#allocation8 + $0xa0] sm:$0xff]
        %v734 = vld [vmem:[#allocation8 + $0xa8] sm:$0xff]
        %v735 = vld [vmem:[#allocation8 + $0xb0] sm:$0xff]
        %v736 = vld [vmem:[#allocation8 + $0xb8] sm:$0xff]
        %v737 = vld [vmem:[#allocation8 + $0xc0] sm:$0xff]
        %v738 = vld [vmem:[#allocation8 + $0xc8] sm:$0xff]
        %v739 = vld [vmem:[#allocation8 + $0xd0] sm:$0xff]
        %v740 = vld [vmem:[#allocation8 + $0xd8] sm:$0xff]
        %v741 = vld [vmem:[#allocation8 + $0xe0] sm:$0xff]
        %v742 = vld [vmem:[#allocation8 + $0xe8] sm:$0xff]
        %v743 = vld [vmem:[#allocation8 + $0xf0] sm:$0xff]
        %v744 = vld [vmem:[#allocation8 + $0xf8] sm:$0xff]
        %v745 = vld [vmem:[#allocation8 + $0x100] sm:$0xff]
        %v746 = vld [vmem:[#allocation8 + $0x108] sm:$0xff]
        %v747 = vld [vmem:[#allocation8 + $0x110] sm:$0xff]
        %v748 = vld [vmem:[#allocation8 + $0x118] sm:$0xff]
        %v749 = vld [vmem:[#allocation8 + $0x120] sm:$0xff]
        %v750 = vld [vmem:[#allocation8 + $0x128] sm:$0xff]
        %v751 = vld [vmem:[#allocation8 + $0x130] sm:$0xff]
        %v752 = vld [vmem:[#allocation8 + $0x138] sm:$0xff]
        %v753 = vld [vmem:[#allocation8 + $0x140] sm:$0xff]
        %v754 = vld [vmem:[#allocation8 + $0x148] sm:$0xff]
        %v755 = vld [vmem:[#allocation8 + $0x150] sm:$0xff]
        %v756 = vld [vmem:[#allocation8 + $0x158] sm:$0xff]
        %v757 = vld [vmem:[#allocation8 + $0x160] sm:$0xff]
        %v758 = vld [vmem:[#allocation8 + $0x168] sm:$0xff]
        %v759 = vld [vmem:[#allocation8 + $0x170] sm:$0xff]
        %v760 = vld [vmem:[#allocation8 + $0x178] sm:$0xff]
        %v809 = vunpack.c.l.b16 %v713
        %v810 = vunpack.c.h.b16 %v713
        %v811 = vunpack.c.l.b16 %v714
        %v812 = vunpack.c.h.b16 %v714
        %v813 = vunpack.c.l.b16 %v715
        %v814 = vunpack.c.h.b16 %v715
        %v815 = vunpack.c.l.b16 %v716
        %v816 = vunpack.c.h.b16 %v716
        %v817 = vunpack.c.l.b16 %v717
        %v818 = vunpack.c.h.b16 %v717
        %v819 = vunpack.c.l.b16 %v718
        %v820 = vunpack.c.h.b16 %v718
        %v821 = vunpack.c.l.b16 %v719
        %v822 = vunpack.c.h.b16 %v719
        %v823 = vunpack.c.l.b16 %v720
        %v824 = vunpack.c.h.b16 %v720
        %v825 = vunpack.c.l.b16 %v721
        %v826 = vunpack.c.h.b16 %v721
        %v827 = vunpack.c.l.b16 %v722
        %v828 = vunpack.c.h.b16 %v722
        %v829 = vunpack.c.l.b16 %v723
        %v830 = vunpack.c.h.b16 %v723
        %v831 = vunpack.c.l.b16 %v724
        %v832 = vunpack.c.h.b16 %v724
        %v833 = vunpack.c.l.b16 %v725
        %v834 = vunpack.c.h.b16 %v725
        %v835 = vunpack.c.l.b16 %v726
        %v836 = vunpack.c.h.b16 %v726
        %v837 = vunpack.c.l.b16 %v727
        %v838 = vunpack.c.h.b16 %v727
        %v839 = vunpack.c.l.b16 %v728
        %v840 = vunpack.c.h.b16 %v728
        %v841 = vunpack.c.l.b16 %v729
        %v842 = vunpack.c.h.b16 %v729
        %v843 = vunpack.c.l.b16 %v730
        %v844 = vunpack.c.h.b16 %v730
        %v845 = vunpack.c.l.b16 %v731
        %v846 = vunpack.c.h.b16 %v731
        %v847 = vunpack.c.l.b16 %v732
        %v848 = vunpack.c.h.b16 %v732
        %v849 = vunpack.c.l.b16 %v733
        %v850 = vunpack.c.h.b16 %v733
        %v851 = vunpack.c.l.b16 %v734
        %v852 = vunpack.c.h.b16 %v734
        %v853 = vunpack.c.l.b16 %v735
        %v854 = vunpack.c.h.b16 %v735
        %v855 = vunpack.c.l.b16 %v736
        %v856 = vunpack.c.h.b16 %v736
        %v857 = vunpack.c.l.b16 %v737
        %v858 = vunpack.c.h.b16 %v737
        %v859 = vunpack.c.l.b16 %v738
        %v860 = vunpack.c.h.b16 %v738
        %v861 = vunpack.c.l.b16 %v739
        %v862 = vunpack.c.h.b16 %v739
        %v863 = vunpack.c.l.b16 %v740
        %v864 = vunpack.c.h.b16 %v740
        %v865 = vunpack.c.l.b16 %v741
        %v866 = vunpack.c.h.b16 %v741
        %v867 = vunpack.c.l.b16 %v742
        %v868 = vunpack.c.h.b16 %v742
        %v869 = vunpack.c.l.b16 %v743
        %v870 = vunpack.c.h.b16 %v743
        %v871 = vunpack.c.l.b16 %v744
        %v872 = vunpack.c.h.b16 %v744
        %v873 = vunpack.c.l.b16 %v745
        %v874 = vunpack.c.h.b16 %v745
        %v875 = vunpack.c.l.b16 %v746
        %v876 = vunpack.c.h.b16 %v746
        %v877 = vunpack.c.l.b16 %v747
        %v878 = vunpack.c.h.b16 %v747
        %v879 = vunpack.c.l.b16 %v748
        %v880 = vunpack.c.h.b16 %v748
        %v881 = vunpack.c.l.b16 %v749
        %v882 = vunpack.c.h.b16 %v749
        %v883 = vunpack.c.l.b16 %v750
        %v884 = vunpack.c.h.b16 %v750
        %v885 = vunpack.c.l.b16 %v751
        %v886 = vunpack.c.h.b16 %v751
        %v887 = vunpack.c.l.b16 %v752
        %v888 = vunpack.c.h.b16 %v752
        %v889 = vunpack.c.l.b16 %v753
        %v890 = vunpack.c.h.b16 %v753
        %v891 = vunpack.c.l.b16 %v754
        %v892 = vunpack.c.h.b16 %v754
        %v893 = vunpack.c.l.b16 %v755
        %v894 = vunpack.c.h.b16 %v755
        %v895 = vunpack.c.l.b16 %v756
        %v896 = vunpack.c.h.b16 %v756
        %v897 = vunpack.c.l.b16 %v757
        %v898 = vunpack.c.h.b16 %v757
        %v899 = vunpack.c.l.b16 %v758
        %v900 = vunpack.c.h.b16 %v758
        %v901 = vunpack.c.l.b16 %v759
        %v902 = vunpack.c.h.b16 %v759
        %v903 = vunpack.c.l.b16 %v760
        %v904 = vunpack.c.h.b16 %v760
        %v905 = vpack.c.b16 %v811, %v809
        %v906 = vpack.c.b16 %v812, %v810
        %v907 = vpack.c.b16 %v815, %v813
        %v908 = vpack.c.b16 %v816, %v814
        %v909 = vpack.c.b16 %v819, %v817
        %v910 = vpack.c.b16 %v820, %v818
        %v911 = vpack.c.b16 %v823, %v821
        %v912 = vpack.c.b16 %v824, %v822
        %v913 = vpack.c.b16 %v827, %v825
        %v914 = vpack.c.b16 %v828, %v826
        %v915 = vpack.c.b16 %v831, %v829
        %v916 = vpack.c.b16 %v832, %v830
        %v917 = vpack.c.b16 %v835, %v833
        %v918 = vpack.c.b16 %v836, %v834
        %v919 = vpack.c.b16 %v839, %v837
        %v920 = vpack.c.b16 %v840, %v838
        %v921 = vpack.c.b16 %v843, %v841
        %v922 = vpack.c.b16 %v844, %v842
        %v923 = vpack.c.b16 %v847, %v845
        %v924 = vpack.c.b16 %v848, %v846
        %v925 = vpack.c.b16 %v851, %v849
        %v926 = vpack.c.b16 %v852, %v850
        %v927 = vpack.c.b16 %v855, %v853
        %v928 = vpack.c.b16 %v856, %v854
        %v929 = vpack.c.b16 %v859, %v857
        %v930 = vpack.c.b16 %v860, %v858
        %v931 = vpack.c.b16 %v863, %v861
        %v932 = vpack.c.b16 %v864, %v862
        %v933 = vpack.c.b16 %v867, %v865
        %v934 = vpack.c.b16 %v868, %v866
        %v935 = vpack.c.b16 %v871, %v869
        %v936 = vpack.c.b16 %v872, %v870
        %v937 = vpack.c.b16 %v875, %v873
        %v938 = vpack.c.b16 %v876, %v874
        %v939 = vpack.c.b16 %v879, %v877
        %v940 = vpack.c.b16 %v880, %v878
        %v941 = vpack.c.b16 %v883, %v881
        %v942 = vpack.c.b16 %v884, %v882
        %v943 = vpack.c.b16 %v887, %v885
        %v944 = vpack.c.b16 %v888, %v886
        %v945 = vpack.c.b16 %v891, %v889
        %v946 = vpack.c.b16 %v892, %v890
        %v947 = vpack.c.b16 %v895, %v893
        %v948 = vpack.c.b16 %v896, %v894
        %v949 = vpack.c.b16 %v899, %v897
        %v950 = vpack.c.b16 %v900, %v898
        %v951 = vpack.c.b16 %v903, %v901
        %v952 = vpack.c.b16 %v904, %v902
        %1001 = vmatpush.bf16.msra.mxu0 %v919
        %1002 = vmatpush.bf16.msra.mxu0 %v917
        %1003 = vmatpush.bf16.msra.mxu0 %v915
        %1004 = vmatpush.bf16.msra.mxu0 %v913
        %1005 = vmatpush.bf16.msra.mxu0 %v911
        %1006 = vmatpush.bf16.msra.mxu0 %v909
        %1007 = vmatpush.bf16.msra.mxu0 %v907
        %1008 = vmatpush.bf16.msra.mxu0 %v905
        %1009 = vmatmul.bf16.gmra.mxu0 %v641
        %v1010 = vpop.f32.mrf.mxu0
        %v1011 = vadd.f32 0.0, %v1010
        %v1012 = vpop.f32.mrf.mxu0
        %v1013 = vadd.f32 0.0, %v1012
        %1014 = vmatmul.bf16.gmra.mxu0 %v644
        %v1015 = vpop.f32.mrf.mxu0
        %v1016 = vadd.f32 0.0, %v1015
        %v1017 = vpop.f32.mrf.mxu0
        %v1018 = vadd.f32 0.0, %v1017
        %1019 = vmatmul.bf16.gmra.mxu0 %v647
        %v1020 = vpop.f32.mrf.mxu0
        %v1021 = vadd.f32 0.0, %v1020
        %v1022 = vpop.f32.mrf.mxu0
        %v1023 = vadd.f32 0.0, %v1022
        %1024 = vmatmul.bf16.gmra.mxu0 %v650
        %v1025 = vpop.f32.mrf.mxu0
        %v1026 = vadd.f32 0.0, %v1025
        %v1027 = vpop.f32.mrf.mxu0
        %v1028 = vadd.f32 0.0, %v1027
        %1029 = vmatmul.bf16.gmra.mxu0 %v653
        %v1030 = vpop.f32.mrf.mxu0
        %v1031 = vadd.f32 0.0, %v1030
        %v1032 = vpop.f32.mrf.mxu0
        %v1033 = vadd.f32 0.0, %v1032
        %1034 = vmatmul.bf16.gmra.mxu0 %v656
        %v1035 = vpop.f32.mrf.mxu0
        %v1036 = vadd.f32 0.0, %v1035
        %v1037 = vpop.f32.mrf.mxu0
        %v1038 = vadd.f32 0.0, %v1037
        %1039 = vmatmul.bf16.gmra.mxu0 %v659
        %v1040 = vpop.f32.mrf.mxu0
        %v1041 = vadd.f32 0.0, %v1040
        %v1042 = vpop.f32.mrf.mxu0
        %v1043 = vadd.f32 0.0, %v1042
        %1044 = vmatmul.bf16.gmra.mxu0 %v662
        %v1045 = vpop.f32.mrf.mxu0
        %v1046 = vadd.f32 0.0, %v1045
        %v1047 = vpop.f32.mrf.mxu0
        %v1048 = vadd.f32 0.0, %v1047
        %1049 = vdwg.mxu0
        %1050 = vmatpush.bf16.msra.mxu0 %v935
        %1051 = vmatpush.bf16.msra.mxu0 %v933
        %1052 = vmatpush.bf16.msra.mxu0 %v931
        %1053 = vmatpush.bf16.msra.mxu0 %v929
        %1054 = vmatpush.bf16.msra.mxu0 %v927
        %1055 = vmatpush.bf16.msra.mxu0 %v925
        %1056 = vmatpush.bf16.msra.mxu0 %v923
        %1057 = vmatpush.bf16.msra.mxu0 %v921
        %1058 = vmatmul.bf16.gmra.mxu0 %v642
        %v1059 = vpop.f32.mrf.mxu0
        %v1060 = vadd.f32 %v1011, %v1059
        %v1061 = vpop.f32.mrf.mxu0
        %v1062 = vadd.f32 %v1013, %v1061
        %1063 = vmatmul.bf16.gmra.mxu0 %v645
        %v1064 = vpop.f32.mrf.mxu0
        %v1065 = vadd.f32 %v1016, %v1064
        %v1066 = vpop.f32.mrf.mxu0
        %v1067 = vadd.f32 %v1018, %v1066
        %1068 = vmatmul.bf16.gmra.mxu0 %v648
        %v1069 = vpop.f32.mrf.mxu0
        %v1070 = vadd.f32 %v1021, %v1069
        %v1071 = vpop.f32.mrf.mxu0
        %v1072 = vadd.f32 %v1023, %v1071
        %1073 = vmatmul.bf16.gmra.mxu0 %v651
        %v1074 = vpop.f32.mrf.mxu0
        %v1075 = vadd.f32 %v1026, %v1074
        %v1076 = vpop.f32.mrf.mxu0
        %v1077 = vadd.f32 %v1028, %v1076
        %1078 = vmatmul.bf16.gmra.mxu0 %v654
        %v1079 = vpop.f32.mrf.mxu0
        %v1080 = vadd.f32 %v1031, %v1079
        %v1081 = vpop.f32.mrf.mxu0
        %v1082 = vadd.f32 %v1033, %v1081
        %1083 = vmatmul.bf16.gmra.mxu0 %v657
        %v1084 = vpop.f32.mrf.mxu0
        %v1085 = vadd.f32 %v1036, %v1084
        %v1086 = vpop.f32.mrf.mxu0
        %v1087 = vadd.f32 %v1038, %v1086
        %1088 = vmatmul.bf16.gmra.mxu0 %v660
        %v1089 = vpop.f32.mrf.mxu0
        %v1090 = vadd.f32 %v1041, %v1089
        %v1091 = vpop.f32.mrf.mxu0
        %v1092 = vadd.f32 %v1043, %v1091
        %1093 = vmatmul.bf16.gmra.mxu0 %v663
        %v1094 = vpop.f32.mrf.mxu0
        %v1095 = vadd.f32 %v1046, %v1094
        %v1096 = vpop.f32.mrf.mxu0
        %v1097 = vadd.f32 %v1048, %v1096
        %1098 = vdwg.mxu0
        %1099 = vmatpush.bf16.msra.mxu0 %v951
        %1100 = vmatpush.bf16.msra.mxu0 %v949
        %1101 = vmatpush.bf16.msra.mxu0 %v947
        %1102 = vmatpush.bf16.msra.mxu0 %v945
        %1103 = vmatpush.bf16.msra.mxu0 %v943
        %1104 = vmatpush.bf16.msra.mxu0 %v941
        %1105 = vmatpush.bf16.msra.mxu0 %v939
        %1106 = vmatpush.bf16.msra.mxu0 %v937
        %1107 = vmatmul.bf16.gmra.mxu0 %v643
        %v1108 = vpop.f32.mrf.mxu0
        %v1109 = vadd.f32 %v1060, %v1108
        %v1110 = vpop.f32.mrf.mxu0
        %v1111 = vadd.f32 %v1062, %v1110
        %1112 = vmatmul.bf16.gmra.mxu0 %v646
        %v1113 = vpop.f32.mrf.mxu0
        %v1114 = vadd.f32 %v1065, %v1113
        %v1115 = vpop.f32.mrf.mxu0
        %v1116 = vadd.f32 %v1067, %v1115
        %1117 = vmatmul.bf16.gmra.mxu0 %v649
        %v1118 = vpop.f32.mrf.mxu0
        %v1119 = vadd.f32 %v1070, %v1118
        %v1120 = vpop.f32.mrf.mxu0
        %v1121 = vadd.f32 %v1072, %v1120
        %1122 = vmatmul.bf16.gmra.mxu0 %v652
        %v1123 = vpop.f32.mrf.mxu0
        %v1124 = vadd.f32 %v1075, %v1123
        %v1125 = vpop.f32.mrf.mxu0
        %v1126 = vadd.f32 %v1077, %v1125
        %1127 = vmatmul.bf16.gmra.mxu0 %v655
        %v1128 = vpop.f32.mrf.mxu0
        %v1129 = vadd.f32 %v1080, %v1128
        %v1130 = vpop.f32.mrf.mxu0
        %v1131 = vadd.f32 %v1082, %v1130
        %1132 = vmatmul.bf16.gmra.mxu0 %v658
        %v1133 = vpop.f32.mrf.mxu0
        %v1134 = vadd.f32 %v1085, %v1133
        %v1135 = vpop.f32.mrf.mxu0
        %v1136 = vadd.f32 %v1087, %v1135
        %1137 = vmatmul.bf16.gmra.mxu0 %v661
        %v1138 = vpop.f32.mrf.mxu0
        %v1139 = vadd.f32 %v1090, %v1138
        %v1140 = vpop.f32.mrf.mxu0
        %v1141 = vadd.f32 %v1092, %v1140
        %1142 = vmatmul.bf16.gmra.mxu0 %v664
        %v1143 = vpop.f32.mrf.mxu0
        %v1144 = vadd.f32 %v1095, %v1143
        %v1145 = vpop.f32.mrf.mxu0
        %v1146 = vadd.f32 %v1097, %v1145
        %1147 = vdwg.mxu0
        %1148 = vmatpush.bf16.msra.mxu0 %v920
        %1149 = vmatpush.bf16.msra.mxu0 %v918
        %1150 = vmatpush.bf16.msra.mxu0 %v916
        %1151 = vmatpush.bf16.msra.mxu0 %v914
        %1152 = vmatpush.bf16.msra.mxu0 %v912
        %1153 = vmatpush.bf16.msra.mxu0 %v910
        %1154 = vmatpush.bf16.msra.mxu0 %v908
        %1155 = vmatpush.bf16.msra.mxu0 %v906
        %1156 = vmatmul.bf16.gmra.mxu0 %v641
        %v1157 = vpop.f32.mrf.mxu0
        %v1158 = vadd.f32 0.0, %v1157
        %v1159 = vpop.f32.mrf.mxu0
        %v1160 = vadd.f32 0.0, %v1159
        %1161 = vmatmul.bf16.gmra.mxu0 %v644
        %v1162 = vpop.f32.mrf.mxu0
        %v1163 = vadd.f32 0.0, %v1162
        %v1164 = vpop.f32.mrf.mxu0
        %v1165 = vadd.f32 0.0, %v1164
        %1166 = vmatmul.bf16.gmra.mxu0 %v647
        %v1167 = vpop.f32.mrf.mxu0
        %v1168 = vadd.f32 0.0, %v1167
        %v1169 = vpop.f32.mrf.mxu0
        %v1170 = vadd.f32 0.0, %v1169
        %1171 = vmatmul.bf16.gmra.mxu0 %v650
        %v1172 = vpop.f32.mrf.mxu0
        %v1173 = vadd.f32 0.0, %v1172
        %v1174 = vpop.f32.mrf.mxu0
        %v1175 = vadd.f32 0.0, %v1174
        %1176 = vmatmul.bf16.gmra.mxu0 %v653
        %v1177 = vpop.f32.mrf.mxu0
        %v1178 = vadd.f32 0.0, %v1177
        %v1179 = vpop.f32.mrf.mxu0
        %v1180 = vadd.f32 0.0, %v1179
        %1181 = vmatmul.bf16.gmra.mxu0 %v656
        %v1182 = vpop.f32.mrf.mxu0
        %v1183 = vadd.f32 0.0, %v1182
        %v1184 = vpop.f32.mrf.mxu0
        %v1185 = vadd.f32 0.0, %v1184
        %1186 = vmatmul.bf16.gmra.mxu0 %v659
        %v1187 = vpop.f32.mrf.mxu0
        %v1188 = vadd.f32 0.0, %v1187
        %v1189 = vpop.f32.mrf.mxu0
        %v1190 = vadd.f32 0.0, %v1189
        %1191 = vmatmul.bf16.gmra.mxu0 %v662
        %v1192 = vpop.f32.mrf.mxu0
        %v1193 = vadd.f32 0.0, %v1192
        %v1194 = vpop.f32.mrf.mxu0
        %v1195 = vadd.f32 0.0, %v1194
        %1196 = vdwg.mxu0
        %1197 = vmatpush.bf16.msra.mxu0 %v936
        %1198 = vmatpush.bf16.msra.mxu0 %v934
        %1199 = vmatpush.bf16.msra.mxu0 %v932
        %1200 = vmatpush.bf16.msra.mxu0 %v930
        %1201 = vmatpush.bf16.msra.mxu0 %v928
        %1202 = vmatpush.bf16.msra.mxu0 %v926
        %1203 = vmatpush.bf16.msra.mxu0 %v924
        %1204 = vmatpush.bf16.msra.mxu0 %v922
        %1205 = vmatmul.bf16.gmra.mxu0 %v642
        %v1206 = vpop.f32.mrf.mxu0
        %v1207 = vadd.f32 %v1158, %v1206
        %v1208 = vpop.f32.mrf.mxu0
        %v1209 = vadd.f32 %v1160, %v1208
        %1210 = vmatmul.bf16.gmra.mxu0 %v645
        %v1211 = vpop.f32.mrf.mxu0
        %v1212 = vadd.f32 %v1163, %v1211
        %v1213 = vpop.f32.mrf.mxu0
        %v1214 = vadd.f32 %v1165, %v1213
        %1215 = vmatmul.bf16.gmra.mxu0 %v648
        %v1216 = vpop.f32.mrf.mxu0
        %v1217 = vadd.f32 %v1168, %v1216
        %v1218 = vpop.f32.mrf.mxu0
        %v1219 = vadd.f32 %v1170, %v1218
        %1220 = vmatmul.bf16.gmra.mxu0 %v651
        %v1221 = vpop.f32.mrf.mxu0
        %v1222 = vadd.f32 %v1173, %v1221
        %v1223 = vpop.f32.mrf.mxu0
        %v1224 = vadd.f32 %v1175, %v1223
        %1225 = vmatmul.bf16.gmra.mxu0 %v654
        %v1226 = vpop.f32.mrf.mxu0
        %v1227 = vadd.f32 %v1178, %v1226
        %v1228 = vpop.f32.mrf.mxu0
        %v1229 = vadd.f32 %v1180, %v1228
        %1230 = vmatmul.bf16.gmra.mxu0 %v657
        %v1231 = vpop.f32.mrf.mxu0
        %v1232 = vadd.f32 %v1183, %v1231
        %v1233 = vpop.f32.mrf.mxu0
        %v1234 = vadd.f32 %v1185, %v1233
        %1235 = vmatmul.bf16.gmra.mxu0 %v660
        %v1236 = vpop.f32.mrf.mxu0
        %v1237 = vadd.f32 %v1188, %v1236
        %v1238 = vpop.f32.mrf.mxu0
        %v1239 = vadd.f32 %v1190, %v1238
        %1240 = vmatmul.bf16.gmra.mxu0 %v663
        %v1241 = vpop.f32.mrf.mxu0
        %v1242 = vadd.f32 %v1193, %v1241
        %v1243 = vpop.f32.mrf.mxu0
        %v1244 = vadd.f32 %v1195, %v1243
        %1245 = vdwg.mxu0
        %1246 = vmatpush.bf16.msra.mxu0 %v952
        %1247 = vmatpush.bf16.msra.mxu0 %v950
        %1248 = vmatpush.bf16.msra.mxu0 %v948
        %1249 = vmatpush.bf16.msra.mxu0 %v946
        %1250 = vmatpush.bf16.msra.mxu0 %v944
        %1251 = vmatpush.bf16.msra.mxu0 %v942
        %1252 = vmatpush.bf16.msra.mxu0 %v940
        %1253 = vmatpush.bf16.msra.mxu0 %v938
        %1254 = vmatmul.bf16.gmra.mxu0 %v643
        %v1255 = vpop.f32.mrf.mxu0
        %v1256 = vadd.f32 %v1207, %v1255
        %v1257 = vpop.f32.mrf.mxu0
        %v1258 = vadd.f32 %v1209, %v1257
        %1259 = vmatmul.bf16.gmra.mxu0 %v646
        %v1260 = vpop.f32.mrf.mxu0
        %v1261 = vadd.f32 %v1212, %v1260
        %v1262 = vpop.f32.mrf.mxu0
        %v1263 = vadd.f32 %v1214, %v1262
        %1264 = vmatmul.bf16.gmra.mxu0 %v649
        %v1265 = vpop.f32.mrf.mxu0
        %v1266 = vadd.f32 %v1217, %v1265
        %v1267 = vpop.f32.mrf.mxu0
        %v1268 = vadd.f32 %v1219, %v1267
        %1269 = vmatmul.bf16.gmra.mxu0 %v652
        %v1270 = vpop.f32.mrf.mxu0
        %v1271 = vadd.f32 %v1222, %v1270
        %v1272 = vpop.f32.mrf.mxu0
        %v1273 = vadd.f32 %v1224, %v1272
        %1274 = vmatmul.bf16.gmra.mxu0 %v655
        %v1275 = vpop.f32.mrf.mxu0
        %v1276 = vadd.f32 %v1227, %v1275
        %v1277 = vpop.f32.mrf.mxu0
        %v1278 = vadd.f32 %v1229, %v1277
        %1279 = vmatmul.bf16.gmra.mxu0 %v658
        %v1280 = vpop.f32.mrf.mxu0
        %v1281 = vadd.f32 %v1232, %v1280
        %v1282 = vpop.f32.mrf.mxu0
        %v1283 = vadd.f32 %v1234, %v1282
        %1284 = vmatmul.bf16.gmra.mxu0 %v661
        %v1285 = vpop.f32.mrf.mxu0
        %v1286 = vadd.f32 %v1237, %v1285
        %v1287 = vpop.f32.mrf.mxu0
        %v1288 = vadd.f32 %v1239, %v1287
        %1289 = vmatmul.bf16.gmra.mxu0 %v664
        %v1290 = vpop.f32.mrf.mxu0
        %v1291 = vadd.f32 %v1242, %v1290
        %v1292 = vpop.f32.mrf.mxu0
        %v1293 = vadd.f32 %v1244, %v1292
        %1294 = vdwg.mxu0
        %v1343 = vunpack.c.l.b16 %v665
        %v1344 = vunpack.c.h.b16 %v665
        %v1345 = vunpack.c.l.b16 %v666
        %v1346 = vunpack.c.h.b16 %v666
        %v1347 = vunpack.c.l.b16 %v667
        %v1348 = vunpack.c.h.b16 %v667
        %v1349 = vunpack.c.l.b16 %v668
        %v1350 = vunpack.c.h.b16 %v668
        %v1351 = vunpack.c.l.b16 %v669
        %v1352 = vunpack.c.h.b16 %v669
        %v1353 = vunpack.c.l.b16 %v670
        %v1354 = vunpack.c.h.b16 %v670
        %v1355 = vunpack.c.l.b16 %v671
        %v1356 = vunpack.c.h.b16 %v671
        %v1357 = vunpack.c.l.b16 %v672
        %v1358 = vunpack.c.h.b16 %v672
        %v1359 = vunpack.c.l.b16 %v673
        %v1360 = vunpack.c.h.b16 %v673
        %v1361 = vunpack.c.l.b16 %v674
        %v1362 = vunpack.c.h.b16 %v674
        %v1363 = vunpack.c.l.b16 %v675
        %v1364 = vunpack.c.h.b16 %v675
        %v1365 = vunpack.c.l.b16 %v676
        %v1366 = vunpack.c.h.b16 %v676
        %v1367 = vunpack.c.l.b16 %v677
        %v1368 = vunpack.c.h.b16 %v677
        %v1369 = vunpack.c.l.b16 %v678
        %v1370 = vunpack.c.h.b16 %v678
        %v1371 = vunpack.c.l.b16 %v679
        %v1372 = vunpack.c.h.b16 %v679
        %v1373 = vunpack.c.l.b16 %v680
        %v1374 = vunpack.c.h.b16 %v680
        %v1375 = vunpack.c.l.b16 %v681
        %v1376 = vunpack.c.h.b16 %v681
        %v1377 = vunpack.c.l.b16 %v682
        %v1378 = vunpack.c.h.b16 %v682
        %v1379 = vunpack.c.l.b16 %v683
        %v1380 = vunpack.c.h.b16 %v683
        %v1381 = vunpack.c.l.b16 %v684
        %v1382 = vunpack.c.h.b16 %v684
        %v1383 = vunpack.c.l.b16 %v685
        %v1384 = vunpack.c.h.b16 %v685
        %v1385 = vunpack.c.l.b16 %v686
        %v1386 = vunpack.c.h.b16 %v686
        %v1387 = vunpack.c.l.b16 %v687
        %v1388 = vunpack.c.h.b16 %v687
        %v1389 = vunpack.c.l.b16 %v688
        %v1390 = vunpack.c.h.b16 %v688
        %v1391 = vunpack.c.l.b16 %v689
        %v1392 = vunpack.c.h.b16 %v689
        %v1393 = vunpack.c.l.b16 %v690
        %v1394 = vunpack.c.h.b16 %v690
        %v1395 = vunpack.c.l.b16 %v691
        %v1396 = vunpack.c.h.b16 %v691
        %v1397 = vunpack.c.l.b16 %v692
        %v1398 = vunpack.c.h.b16 %v692
        %v1399 = vunpack.c.l.b16 %v693
        %v1400 = vunpack.c.h.b16 %v693
        %v1401 = vunpack.c.l.b16 %v694
        %v1402 = vunpack.c.h.b16 %v694
        %v1403 = vunpack.c.l.b16 %v695
        %v1404 = vunpack.c.h.b16 %v695
        %v1405 = vunpack.c.l.b16 %v696
        %v1406 = vunpack.c.h.b16 %v696
        %v1407 = vunpack.c.l.b16 %v697
        %v1408 = vunpack.c.h.b16 %v697
        %v1409 = vunpack.c.l.b16 %v698
        %v1410 = vunpack.c.h.b16 %v698
        %v1411 = vunpack.c.l.b16 %v699
        %v1412 = vunpack.c.h.b16 %v699
        %v1413 = vunpack.c.l.b16 %v700
        %v1414 = vunpack.c.h.b16 %v700
        %v1415 = vunpack.c.l.b16 %v701
        %v1416 = vunpack.c.h.b16 %v701
        %v1417 = vunpack.c.l.b16 %v702
        %v1418 = vunpack.c.h.b16 %v702
        %v1419 = vunpack.c.l.b16 %v703
        %v1420 = vunpack.c.h.b16 %v703
        %v1421 = vunpack.c.l.b16 %v704
        %v1422 = vunpack.c.h.b16 %v704
        %v1423 = vunpack.c.l.b16 %v705
        %v1424 = vunpack.c.h.b16 %v705
        %v1425 = vunpack.c.l.b16 %v706
        %v1426 = vunpack.c.h.b16 %v706
        %v1427 = vunpack.c.l.b16 %v707
        %v1428 = vunpack.c.h.b16 %v707
        %v1429 = vunpack.c.l.b16 %v708
        %v1430 = vunpack.c.h.b16 %v708
        %v1431 = vunpack.c.l.b16 %v709
        %v1432 = vunpack.c.h.b16 %v709
        %v1433 = vunpack.c.l.b16 %v710
        %v1434 = vunpack.c.h.b16 %v710
        %v1435 = vunpack.c.l.b16 %v711
        %v1436 = vunpack.c.h.b16 %v711
        %v1437 = vunpack.c.l.b16 %v712
        %v1438 = vunpack.c.h.b16 %v712
        %v1439 = vpack.c.b16 %v1345, %v1343
        %v1440 = vpack.c.b16 %v1346, %v1344
        %v1441 = vpack.c.b16 %v1349, %v1347
        %v1442 = vpack.c.b16 %v1350, %v1348
        %v1443 = vpack.c.b16 %v1353, %v1351
        %v1444 = vpack.c.b16 %v1354, %v1352
        %v1445 = vpack.c.b16 %v1357, %v1355
        %v1446 = vpack.c.b16 %v1358, %v1356
        %v1447 = vpack.c.b16 %v1361, %v1359
        %v1448 = vpack.c.b16 %v1362, %v1360
        %v1449 = vpack.c.b16 %v1365, %v1363
        %v1450 = vpack.c.b16 %v1366, %v1364
        %v1451 = vpack.c.b16 %v1369, %v1367
        %v1452 = vpack.c.b16 %v1370, %v1368
        %v1453 = vpack.c.b16 %v1373, %v1371
        %v1454 = vpack.c.b16 %v1374, %v1372
        %v1455 = vpack.c.b16 %v1377, %v1375
        %v1456 = vpack.c.b16 %v1378, %v1376
        %v1457 = vpack.c.b16 %v1381, %v1379
        %v1458 = vpack.c.b16 %v1382, %v1380
        %v1459 = vpack.c.b16 %v1385, %v1383
        %v1460 = vpack.c.b16 %v1386, %v1384
        %v1461 = vpack.c.b16 %v1389, %v1387
        %v1462 = vpack.c.b16 %v1390, %v1388
        %v1463 = vpack.c.b16 %v1393, %v1391
        %v1464 = vpack.c.b16 %v1394, %v1392
        %v1465 = vpack.c.b16 %v1397, %v1395
        %v1466 = vpack.c.b16 %v1398, %v1396
        %v1467 = vpack.c.b16 %v1401, %v1399
        %v1468 = vpack.c.b16 %v1402, %v1400
        %v1469 = vpack.c.b16 %v1405, %v1403
        %v1470 = vpack.c.b16 %v1406, %v1404
        %v1471 = vpack.c.b16 %v1409, %v1407
        %v1472 = vpack.c.b16 %v1410, %v1408
        %v1473 = vpack.c.b16 %v1413, %v1411
        %v1474 = vpack.c.b16 %v1414, %v1412
        %v1475 = vpack.c.b16 %v1417, %v1415
        %v1476 = vpack.c.b16 %v1418, %v1416
        %v1477 = vpack.c.b16 %v1421, %v1419
        %v1478 = vpack.c.b16 %v1422, %v1420
        %v1479 = vpack.c.b16 %v1425, %v1423
        %v1480 = vpack.c.b16 %v1426, %v1424
        %v1481 = vpack.c.b16 %v1429, %v1427
        %v1482 = vpack.c.b16 %v1430, %v1428
        %v1483 = vpack.c.b16 %v1433, %v1431
        %v1484 = vpack.c.b16 %v1434, %v1432
        %v1485 = vpack.c.b16 %v1437, %v1435
        %v1486 = vpack.c.b16 %v1438, %v1436
        %1535 = vmatpush.bf16.msra.mxu0 %v1453
        %1536 = vmatpush.bf16.msra.mxu0 %v1451
        %1537 = vmatpush.bf16.msra.mxu0 %v1449
        %1538 = vmatpush.bf16.msra.mxu0 %v1447
        %1539 = vmatpush.bf16.msra.mxu0 %v1445
        %1540 = vmatpush.bf16.msra.mxu0 %v1443
        %1541 = vmatpush.bf16.msra.mxu0 %v1441
        %1542 = vmatpush.bf16.msra.mxu0 %v1439
        %1543 = vmatmul.bf16.gmra.mxu0 %v569
        %v1544 = vpop.f32.mrf.mxu0
        %v1545 = vadd.f32 %v1109, %v1544
        %v1546 = vpop.f32.mrf.mxu0
        %v1547 = vadd.f32 %v1111, %v1546
        %1548 = vmatmul.bf16.gmra.mxu0 %v572
        %v1549 = vpop.f32.mrf.mxu0
        %v1550 = vadd.f32 %v1114, %v1549
        %v1551 = vpop.f32.mrf.mxu0
        %v1552 = vadd.f32 %v1116, %v1551
        %1553 = vmatmul.bf16.gmra.mxu0 %v575
        %v1554 = vpop.f32.mrf.mxu0
        %v1555 = vadd.f32 %v1119, %v1554
        %v1556 = vpop.f32.mrf.mxu0
        %v1557 = vadd.f32 %v1121, %v1556
        %1558 = vmatmul.bf16.gmra.mxu0 %v578
        %v1559 = vpop.f32.mrf.mxu0
        %v1560 = vadd.f32 %v1124, %v1559
        %v1561 = vpop.f32.mrf.mxu0
        %v1562 = vadd.f32 %v1126, %v1561
        %1563 = vmatmul.bf16.gmra.mxu0 %v581
        %v1564 = vpop.f32.mrf.mxu0
        %v1565 = vadd.f32 %v1129, %v1564
        %v1566 = vpop.f32.mrf.mxu0
        %v1567 = vadd.f32 %v1131, %v1566
        %1568 = vmatmul.bf16.gmra.mxu0 %v584
        %v1569 = vpop.f32.mrf.mxu0
        %v1570 = vadd.f32 %v1134, %v1569
        %v1571 = vpop.f32.mrf.mxu0
        %v1572 = vadd.f32 %v1136, %v1571
        %1573 = vmatmul.bf16.gmra.mxu0 %v587
        %v1574 = vpop.f32.mrf.mxu0
        %v1575 = vadd.f32 %v1139, %v1574
        %v1576 = vpop.f32.mrf.mxu0
        %v1577 = vadd.f32 %v1141, %v1576
        %1578 = vmatmul.bf16.gmra.mxu0 %v590
        %v1579 = vpop.f32.mrf.mxu0
        %v1580 = vadd.f32 %v1144, %v1579
        %v1581 = vpop.f32.mrf.mxu0
        %v1582 = vadd.f32 %v1146, %v1581
        %1583 = vdwg.mxu0
        %1584 = vmatpush.bf16.msra.mxu0 %v1469
        %1585 = vmatpush.bf16.msra.mxu0 %v1467
        %1586 = vmatpush.bf16.msra.mxu0 %v1465
        %1587 = vmatpush.bf16.msra.mxu0 %v1463
        %1588 = vmatpush.bf16.msra.mxu0 %v1461
        %1589 = vmatpush.bf16.msra.mxu0 %v1459
        %1590 = vmatpush.bf16.msra.mxu0 %v1457
        %1591 = vmatpush.bf16.msra.mxu0 %v1455
        %1592 = vmatmul.bf16.gmra.mxu0 %v570
        %v1593 = vpop.f32.mrf.mxu0
        %v1594 = vadd.f32 %v1545, %v1593
        %v1595 = vpop.f32.mrf.mxu0
        %v1596 = vadd.f32 %v1547, %v1595
        %1597 = vmatmul.bf16.gmra.mxu0 %v573
        %v1598 = vpop.f32.mrf.mxu0
        %v1599 = vadd.f32 %v1550, %v1598
        %v1600 = vpop.f32.mrf.mxu0
        %v1601 = vadd.f32 %v1552, %v1600
        %1602 = vmatmul.bf16.gmra.mxu0 %v576
        %v1603 = vpop.f32.mrf.mxu0
        %v1604 = vadd.f32 %v1555, %v1603
        %v1605 = vpop.f32.mrf.mxu0
        %v1606 = vadd.f32 %v1557, %v1605
        %1607 = vmatmul.bf16.gmra.mxu0 %v579
        %v1608 = vpop.f32.mrf.mxu0
        %v1609 = vadd.f32 %v1560, %v1608
        %v1610 = vpop.f32.mrf.mxu0
        %v1611 = vadd.f32 %v1562, %v1610
        %1612 = vmatmul.bf16.gmra.mxu0 %v582
        %v1613 = vpop.f32.mrf.mxu0
        %v1614 = vadd.f32 %v1565, %v1613
        %v1615 = vpop.f32.mrf.mxu0
        %v1616 = vadd.f32 %v1567, %v1615
        %1617 = vmatmul.bf16.gmra.mxu0 %v585
        %v1618 = vpop.f32.mrf.mxu0
        %v1619 = vadd.f32 %v1570, %v1618
        %v1620 = vpop.f32.mrf.mxu0
        %v1621 = vadd.f32 %v1572, %v1620
        %1622 = vmatmul.bf16.gmra.mxu0 %v588
        %v1623 = vpop.f32.mrf.mxu0
        %v1624 = vadd.f32 %v1575, %v1623
        %v1625 = vpop.f32.mrf.mxu0
        %v1626 = vadd.f32 %v1577, %v1625
        %1627 = vmatmul.bf16.gmra.mxu0 %v591
        %v1628 = vpop.f32.mrf.mxu0
        %v1629 = vadd.f32 %v1580, %v1628
        %v1630 = vpop.f32.mrf.mxu0
        %v1631 = vadd.f32 %v1582, %v1630
        %1632 = vdwg.mxu0
        %1633 = vmatpush.bf16.msra.mxu0 %v1485
        %1634 = vmatpush.bf16.msra.mxu0 %v1483
        %1635 = vmatpush.bf16.msra.mxu0 %v1481
        %1636 = vmatpush.bf16.msra.mxu0 %v1479
        %1637 = vmatpush.bf16.msra.mxu0 %v1477
        %1638 = vmatpush.bf16.msra.mxu0 %v1475
        %1639 = vmatpush.bf16.msra.mxu0 %v1473
        %1640 = vmatpush.bf16.msra.mxu0 %v1471
        %1641 = vmatmul.bf16.gmra.mxu0 %v571
        %v1642 = vpop.f32.mrf.mxu0
        %v1643 = vadd.f32 %v1594, %v1642
        %v1644 = vpop.f32.mrf.mxu0
        %v1645 = vadd.f32 %v1596, %v1644
        %1646 = vmatmul.bf16.gmra.mxu0 %v574
        %v1647 = vpop.f32.mrf.mxu0
        %v1648 = vadd.f32 %v1599, %v1647
        %v1649 = vpop.f32.mrf.mxu0
        %v1650 = vadd.f32 %v1601, %v1649
        %1651 = vmatmul.bf16.gmra.mxu0 %v577
        %v1652 = vpop.f32.mrf.mxu0
        %v1653 = vadd.f32 %v1604, %v1652
        %v1654 = vpop.f32.mrf.mxu0
        %v1655 = vadd.f32 %v1606, %v1654
        %1656 = vmatmul.bf16.gmra.mxu0 %v580
        %v1657 = vpop.f32.mrf.mxu0
        %v1658 = vadd.f32 %v1609, %v1657
        %v1659 = vpop.f32.mrf.mxu0
        %v1660 = vadd.f32 %v1611, %v1659
        %1661 = vmatmul.bf16.gmra.mxu0 %v583
        %v1662 = vpop.f32.mrf.mxu0
        %v1663 = vadd.f32 %v1614, %v1662
        %v1664 = vpop.f32.mrf.mxu0
        %v1665 = vadd.f32 %v1616, %v1664
        %1666 = vmatmul.bf16.gmra.mxu0 %v586
        %v1667 = vpop.f32.mrf.mxu0
        %v1668 = vadd.f32 %v1619, %v1667
        %v1669 = vpop.f32.mrf.mxu0
        %v1670 = vadd.f32 %v1621, %v1669
        %1671 = vmatmul.bf16.gmra.mxu0 %v589
        %v1672 = vpop.f32.mrf.mxu0
        %v1673 = vadd.f32 %v1624, %v1672
        %v1674 = vpop.f32.mrf.mxu0
        %v1675 = vadd.f32 %v1626, %v1674
        %1676 = vmatmul.bf16.gmra.mxu0 %v592
        %v1677 = vpop.f32.mrf.mxu0
        %v1678 = vadd.f32 %v1629, %v1677
        %v1679 = vpop.f32.mrf.mxu0
        %v1680 = vadd.f32 %v1631, %v1679
        %1681 = vdwg.mxu0
        %1682 = vmatpush.bf16.msra.mxu0 %v1454
        %1683 = vmatpush.bf16.msra.mxu0 %v1452
        %1684 = vmatpush.bf16.msra.mxu0 %v1450
        %1685 = vmatpush.bf16.msra.mxu0 %v1448
        %1686 = vmatpush.bf16.msra.mxu0 %v1446
        %1687 = vmatpush.bf16.msra.mxu0 %v1444
        %1688 = vmatpush.bf16.msra.mxu0 %v1442
        %1689 = vmatpush.bf16.msra.mxu0 %v1440
        %1690 = vmatmul.bf16.gmra.mxu0 %v569
        %v1691 = vpop.f32.mrf.mxu0
        %v1692 = vadd.f32 %v1256, %v1691
        %v1693 = vpop.f32.mrf.mxu0
        %v1694 = vadd.f32 %v1258, %v1693
        %1695 = vmatmul.bf16.gmra.mxu0 %v572
        %v1696 = vpop.f32.mrf.mxu0
        %v1697 = vadd.f32 %v1261, %v1696
        %v1698 = vpop.f32.mrf.mxu0
        %v1699 = vadd.f32 %v1263, %v1698
        %1700 = vmatmul.bf16.gmra.mxu0 %v575
        %v1701 = vpop.f32.mrf.mxu0
        %v1702 = vadd.f32 %v1266, %v1701
        %v1703 = vpop.f32.mrf.mxu0
        %v1704 = vadd.f32 %v1268, %v1703
        %1705 = vmatmul.bf16.gmra.mxu0 %v578
        %v1706 = vpop.f32.mrf.mxu0
        %v1707 = vadd.f32 %v1271, %v1706
        %v1708 = vpop.f32.mrf.mxu0
        %v1709 = vadd.f32 %v1273, %v1708
        %1710 = vmatmul.bf16.gmra.mxu0 %v581
        %v1711 = vpop.f32.mrf.mxu0
        %v1712 = vadd.f32 %v1276, %v1711
        %v1713 = vpop.f32.mrf.mxu0
        %v1714 = vadd.f32 %v1278, %v1713
        %1715 = vmatmul.bf16.gmra.mxu0 %v584
        %v1716 = vpop.f32.mrf.mxu0
        %v1717 = vadd.f32 %v1281, %v1716
        %v1718 = vpop.f32.mrf.mxu0
        %v1719 = vadd.f32 %v1283, %v1718
        %1720 = vmatmul.bf16.gmra.mxu0 %v587
        %v1721 = vpop.f32.mrf.mxu0
        %v1722 = vadd.f32 %v1286, %v1721
        %v1723 = vpop.f32.mrf.mxu0
        %v1724 = vadd.f32 %v1288, %v1723
        %1725 = vmatmul.bf16.gmra.mxu0 %v590
        %v1726 = vpop.f32.mrf.mxu0
        %v1727 = vadd.f32 %v1291, %v1726
        %v1728 = vpop.f32.mrf.mxu0
        %v1729 = vadd.f32 %v1293, %v1728
        %1730 = vdwg.mxu0
        %1731 = vmatpush.bf16.msra.mxu0 %v1470
        %1732 = vmatpush.bf16.msra.mxu0 %v1468
        %1733 = vmatpush.bf16.msra.mxu0 %v1466
        %1734 = vmatpush.bf16.msra.mxu0 %v1464
        %1735 = vmatpush.bf16.msra.mxu0 %v1462
        %1736 = vmatpush.bf16.msra.mxu0 %v1460
        %1737 = vmatpush.bf16.msra.mxu0 %v1458
        %1738 = vmatpush.bf16.msra.mxu0 %v1456
        %1739 = vmatmul.bf16.gmra.mxu0 %v570
        %v1740 = vpop.f32.mrf.mxu0
        %v1741 = vadd.f32 %v1692, %v1740
        %v1742 = vpop.f32.mrf.mxu0
        %v1743 = vadd.f32 %v1694, %v1742
        %1744 = vmatmul.bf16.gmra.mxu0 %v573
        %v1745 = vpop.f32.mrf.mxu0
        %v1746 = vadd.f32 %v1697, %v1745
        %v1747 = vpop.f32.mrf.mxu0
        %v1748 = vadd.f32 %v1699, %v1747
        %1749 = vmatmul.bf16.gmra.mxu0 %v576
        %v1750 = vpop.f32.mrf.mxu0
        %v1751 = vadd.f32 %v1702, %v1750
        %v1752 = vpop.f32.mrf.mxu0
        %v1753 = vadd.f32 %v1704, %v1752
        %1754 = vmatmul.bf16.gmra.mxu0 %v579
        %v1755 = vpop.f32.mrf.mxu0
        %v1756 = vadd.f32 %v1707, %v1755
        %v1757 = vpop.f32.mrf.mxu0
        %v1758 = vadd.f32 %v1709, %v1757
        %1759 = vmatmul.bf16.gmra.mxu0 %v582
        %v1760 = vpop.f32.mrf.mxu0
        %v1761 = vadd.f32 %v1712, %v1760
        %v1762 = vpop.f32.mrf.mxu0
        %v1763 = vadd.f32 %v1714, %v1762
        %1764 = vmatmul.bf16.gmra.mxu0 %v585
        %v1765 = vpop.f32.mrf.mxu0
        %v1766 = vadd.f32 %v1717, %v1765
        %v1767 = vpop.f32.mrf.mxu0
        %v1768 = vadd.f32 %v1719, %v1767
        %1769 = vmatmul.bf16.gmra.mxu0 %v588
        %v1770 = vpop.f32.mrf.mxu0
        %v1771 = vadd.f32 %v1722, %v1770
        %v1772 = vpop.f32.mrf.mxu0
        %v1773 = vadd.f32 %v1724, %v1772
        %1774 = vmatmul.bf16.gmra.mxu0 %v591
        %v1775 = vpop.f32.mrf.mxu0
        %v1776 = vadd.f32 %v1727, %v1775
        %v1777 = vpop.f32.mrf.mxu0
        %v1778 = vadd.f32 %v1729, %v1777
        %1779 = vdwg.mxu0
        %1780 = vmatpush.bf16.msra.mxu0 %v1486
        %1781 = vmatpush.bf16.msra.mxu0 %v1484
        %1782 = vmatpush.bf16.msra.mxu0 %v1482
        %1783 = vmatpush.bf16.msra.mxu0 %v1480
        %1784 = vmatpush.bf16.msra.mxu0 %v1478
        %1785 = vmatpush.bf16.msra.mxu0 %v1476
        %1786 = vmatpush.bf16.msra.mxu0 %v1474
        %1787 = vmatpush.bf16.msra.mxu0 %v1472
        %1788 = vmatmul.bf16.gmra.mxu0 %v571
        %v1789 = vpop.f32.mrf.mxu0
        %v1790 = vadd.f32 %v1741, %v1789
        %v1791 = vpop.f32.mrf.mxu0
        %v1792 = vadd.f32 %v1743, %v1791
        %1793 = vmatmul.bf16.gmra.mxu0 %v574
        %v1794 = vpop.f32.mrf.mxu0
        %v1795 = vadd.f32 %v1746, %v1794
        %v1796 = vpop.f32.mrf.mxu0
        %v1797 = vadd.f32 %v1748, %v1796
        %1798 = vmatmul.bf16.gmra.mxu0 %v577
        %v1799 = vpop.f32.mrf.mxu0
        %v1800 = vadd.f32 %v1751, %v1799
        %v1801 = vpop.f32.mrf.mxu0
        %v1802 = vadd.f32 %v1753, %v1801
        %1803 = vmatmul.bf16.gmra.mxu0 %v580
        %v1804 = vpop.f32.mrf.mxu0
        %v1805 = vadd.f32 %v1756, %v1804
        %v1806 = vpop.f32.mrf.mxu0
        %v1807 = vadd.f32 %v1758, %v1806
        %1808 = vmatmul.bf16.gmra.mxu0 %v583
        %v1809 = vpop.f32.mrf.mxu0
        %v1810 = vadd.f32 %v1761, %v1809
        %v1811 = vpop.f32.mrf.mxu0
        %v1812 = vadd.f32 %v1763, %v1811
        %1813 = vmatmul.bf16.gmra.mxu0 %v586
        %v1814 = vpop.f32.mrf.mxu0
        %v1815 = vadd.f32 %v1766, %v1814
        %v1816 = vpop.f32.mrf.mxu0
        %v1817 = vadd.f32 %v1768, %v1816
        %1818 = vmatmul.bf16.gmra.mxu0 %v589
        %v1819 = vpop.f32.mrf.mxu0
        %v1820 = vadd.f32 %v1771, %v1819
        %v1821 = vpop.f32.mrf.mxu0
        %v1822 = vadd.f32 %v1773, %v1821
        %1823 = vmatmul.bf16.gmra.mxu0 %v592
        %v1824 = vpop.f32.mrf.mxu0
        %v1825 = vadd.f32 %v1776, %v1824
        %v1826 = vpop.f32.mrf.mxu0
        %v1827 = vadd.f32 %v1778, %v1826
        %1828 = vdwg.mxu0
        %v1829 = vld [vmem:[#allocation10] sm:$0x3]
        %v1831 = vperm.slane %v1829, 0
        %v1832 = vperm.slane %v1829, 1
        %v1835 = vadd.f32 %v1643, %v1831
        %v1836 = vadd.f32 %v1790, %v1832
        %v1837 = vadd.f32 %v1645, %v1831
        %v1838 = vadd.f32 %v1792, %v1832
        %v1839 = vadd.f32 %v1648, %v1831
        %v1840 = vadd.f32 %v1795, %v1832
        %v1841 = vadd.f32 %v1650, %v1831
        %v1842 = vadd.f32 %v1797, %v1832
        %v1843 = vadd.f32 %v1653, %v1831
        %v1844 = vadd.f32 %v1800, %v1832
        %v1845 = vadd.f32 %v1655, %v1831
        %v1846 = vadd.f32 %v1802, %v1832
        %v1847 = vadd.f32 %v1658, %v1831
        %v1848 = vadd.f32 %v1805, %v1832
        %v1849 = vadd.f32 %v1660, %v1831
        %v1850 = vadd.f32 %v1807, %v1832
        %v1851 = vadd.f32 %v1663, %v1831
        %v1852 = vadd.f32 %v1810, %v1832
        %v1853 = vadd.f32 %v1665, %v1831
        %v1854 = vadd.f32 %v1812, %v1832
        %v1855 = vadd.f32 %v1668, %v1831
        %v1856 = vadd.f32 %v1815, %v1832
        %v1857 = vadd.f32 %v1670, %v1831
        %v1858 = vadd.f32 %v1817, %v1832
        %v1859 = vadd.f32 %v1673, %v1831
        %v1860 = vadd.f32 %v1820, %v1832
        %v1861 = vadd.f32 %v1675, %v1831
        %v1862 = vadd.f32 %v1822, %v1832
        %v1863 = vadd.f32 %v1678, %v1831
        %v1864 = vadd.f32 %v1825, %v1832
        %v1865 = vadd.f32 %v1680, %v1831
        %v1866 = vadd.f32 %v1827, %v1832
        %v1867 = vmax.f32 %v1835, 0.0
        %v1868 = vmax.f32 %v1836, 0.0
        %v1869 = vmax.f32 %v1837, 0.0
        %v1870 = vmax.f32 %v1838, 0.0
        %v1871 = vmax.f32 %v1839, 0.0
        %v1872 = vmax.f32 %v1840, 0.0
        %v1873 = vmax.f32 %v1841, 0.0
        %v1874 = vmax.f32 %v1842, 0.0
        %v1875 = vmax.f32 %v1843, 0.0
        %v1876 = vmax.f32 %v1844, 0.0
        %v1877 = vmax.f32 %v1845, 0.0
        %v1878 = vmax.f32 %v1846, 0.0
        %v1879 = vmax.f32 %v1847, 0.0
        %v1880 = vmax.f32 %v1848, 0.0
        %v1881 = vmax.f32 %v1849, 0.0
        %v1882 = vmax.f32 %v1850, 0.0
        %v1883 = vmax.f32 %v1851, 0.0
        %v1884 = vmax.f32 %v1852, 0.0
        %v1885 = vmax.f32 %v1853, 0.0
        %v1886 = vmax.f32 %v1854, 0.0
        %v1887 = vmax.f32 %v1855, 0.0
        %v1888 = vmax.f32 %v1856, 0.0
        %v1889 = vmax.f32 %v1857, 0.0
        %v1890 = vmax.f32 %v1858, 0.0
        %v1891 = vmax.f32 %v1859, 0.0
        %v1892 = vmax.f32 %v1860, 0.0
        %v1893 = vmax.f32 %v1861, 0.0
        %v1894 = vmax.f32 %v1862, 0.0
        %v1895 = vmax.f32 %v1863, 0.0
        %v1896 = vmax.f32 %v1864, 0.0
        %v1897 = vmax.f32 %v1865, 0.0
        %v1898 = vmax.f32 %v1866, 0.0
        %v1899 = vpack.c.bf16 %v1869, %v1867
        %v1900 = vpack.c.bf16 %v1870, %v1868
        %v1901 = vpack.c.bf16 %v1873, %v1871
        %v1902 = vpack.c.bf16 %v1874, %v1872
        %v1903 = vpack.c.bf16 %v1877, %v1875
        %v1904 = vpack.c.bf16 %v1878, %v1876
        %v1905 = vpack.c.bf16 %v1881, %v1879
        %v1906 = vpack.c.bf16 %v1882, %v1880
        %v1907 = vpack.c.bf16 %v1885, %v1883
        %v1908 = vpack.c.bf16 %v1886, %v1884
        %v1909 = vpack.c.bf16 %v1889, %v1887
        %v1910 = vpack.c.bf16 %v1890, %v1888
        %v1911 = vpack.c.bf16 %v1893, %v1891
        %v1912 = vpack.c.bf16 %v1894, %v1892
        %v1913 = vpack.c.bf16 %v1897, %v1895
        %v1914 = vpack.c.bf16 %v1898, %v1896
        %v1915 = vld [vmem:[#allocation11] sm:$0xf]
        %v1916 = vld [vmem:[#allocation11 + $0x4] sm:$0xf]
        %v1917 = vld [vmem:[#allocation11 + $0x8] sm:$0xf]
        %v1918 = vld [vmem:[#allocation11 + $0xc] sm:$0xf]
        %v1919 = vld [vmem:[#allocation11 + $0x10] sm:$0xf]
        %v1920 = vld [vmem:[#allocation11 + $0x14] sm:$0xf]
        %v1921 = vld [vmem:[#allocation11 + $0x18] sm:$0xf]
        %v1922 = vld [vmem:[#allocation11 + $0x1c] sm:$0xf]
        %v1923 = vld [vmem:[#allocation11 + $0x20] sm:$0xf]
        %v1924 = vld [vmem:[#allocation11 + $0x24] sm:$0xf]
        %v1925 = vld [vmem:[#allocation11 + $0x28] sm:$0xf]
        %v1926 = vld [vmem:[#allocation11 + $0x2c] sm:$0xf]
        %v1927 = vld [vmem:[#allocation11 + $0x30] sm:$0xf]
        %v1928 = vld [vmem:[#allocation11 + $0x34] sm:$0xf]
        %v1929 = vld [vmem:[#allocation11 + $0x38] sm:$0xf]
        %v1930 = vld [vmem:[#allocation11 + $0x3c] sm:$0xf]
        %v1931 = vld [vmem:[#allocation11 + $0x40] sm:$0xf]
        %v1932 = vld [vmem:[#allocation11 + $0x44] sm:$0xf]
        %v1933 = vld [vmem:[#allocation11 + $0x48] sm:$0xf]
        %v1934 = vld [vmem:[#allocation11 + $0x4c] sm:$0xf]
        %v1935 = vld [vmem:[#allocation11 + $0x50] sm:$0xf]
        %v1936 = vld [vmem:[#allocation11 + $0x54] sm:$0xf]
        %v1937 = vld [vmem:[#allocation11 + $0x58] sm:$0xf]
        %v1938 = vld [vmem:[#allocation11 + $0x5c] sm:$0xf]
        %v1939 = vld [vmem:[#allocation11 + $0x60] sm:$0xf]
        %v1940 = vld [vmem:[#allocation11 + $0x64] sm:$0xf]
        %v1941 = vld [vmem:[#allocation11 + $0x68] sm:$0xf]
        %v1942 = vld [vmem:[#allocation11 + $0x6c] sm:$0xf]
        %v1943 = vld [vmem:[#allocation11 + $0x70] sm:$0xf]
        %v1944 = vld [vmem:[#allocation11 + $0x74] sm:$0xf]
        %v1945 = vld [vmem:[#allocation11 + $0x78] sm:$0xf]
        %v1946 = vld [vmem:[#allocation11 + $0x7c] sm:$0xf]
        %v1947 = vld [vmem:[#allocation13] sm:$0x1]
        %v1949 = vperm.slane %v1947, 0
        %v1983 = vunpack.c.l.b16 %v1915
        %v1984 = vunpack.c.l.b16 %v1916
        %v1985 = vunpack.c.l.b16 %v1917
        %v1986 = vunpack.c.l.b16 %v1918
        %v1987 = vunpack.c.l.b16 %v1919
        %v1988 = vunpack.c.l.b16 %v1920
        %v1989 = vunpack.c.l.b16 %v1921
        %v1990 = vunpack.c.l.b16 %v1922
        %v1991 = vunpack.c.l.b16 %v1923
        %v1992 = vunpack.c.l.b16 %v1924
        %v1993 = vunpack.c.l.b16 %v1925
        %v1994 = vunpack.c.l.b16 %v1926
        %v1995 = vunpack.c.l.b16 %v1927
        %v1996 = vunpack.c.l.b16 %v1928
        %v1997 = vunpack.c.l.b16 %v1929
        %v1998 = vunpack.c.l.b16 %v1930
        %v1999 = vunpack.c.l.b16 %v1931
        %v2000 = vunpack.c.l.b16 %v1932
        %v2001 = vunpack.c.l.b16 %v1933
        %v2002 = vunpack.c.l.b16 %v1934
        %v2003 = vunpack.c.l.b16 %v1935
        %v2004 = vunpack.c.l.b16 %v1936
        %v2005 = vunpack.c.l.b16 %v1937
        %v2006 = vunpack.c.l.b16 %v1938
        %v2007 = vunpack.c.l.b16 %v1939
        %v2008 = vunpack.c.l.b16 %v1940
        %v2009 = vunpack.c.l.b16 %v1941
        %v2010 = vunpack.c.l.b16 %v1942
        %v2011 = vunpack.c.l.b16 %v1943
        %v2012 = vunpack.c.l.b16 %v1944
        %v2013 = vunpack.c.l.b16 %v1945
        %v2014 = vunpack.c.l.b16 %v1946
        %v2015 = vpack.c.b16 %v1984, %v1983
        %v2016 = vpack.c.b16 %v1986, %v1985
        %v2017 = vpack.c.b16 %v1988, %v1987
        %v2018 = vpack.c.b16 %v1990, %v1989
        %v2019 = vpack.c.b16 %v1992, %v1991
        %v2020 = vpack.c.b16 %v1994, %v1993
        %v2021 = vpack.c.b16 %v1996, %v1995
        %v2022 = vpack.c.b16 %v1998, %v1997
        %v2023 = vpack.c.b16 %v2000, %v1999
        %v2024 = vpack.c.b16 %v2002, %v2001
        %v2025 = vpack.c.b16 %v2004, %v2003
        %v2026 = vpack.c.b16 %v2006, %v2005
        %v2027 = vpack.c.b16 %v2008, %v2007
        %v2028 = vpack.c.b16 %v2010, %v2009
        %v2029 = vpack.c.b16 %v2012, %v2011
        %v2030 = vpack.c.b16 %v2014, %v2013
        %2047 = vmatpush.bf16.msra.mxu0 %v2022
        %2048 = vmatpush.bf16.msra.mxu0 %v2021
        %2049 = vmatpush.bf16.msra.mxu0 %v2020
        %2050 = vmatpush.bf16.msra.mxu0 %v2019
        %2051 = vmatpush.bf16.msra.mxu0 %v2018
        %2052 = vmatpush.bf16.msra.mxu0 %v2017
        %2053 = vmatpush.bf16.msra.mxu0 %v2016
        %2054 = vmatpush.bf16.msra.mxu0 %v2015
        %2055 = vmatmul.bf16.gmra.mxu0 %v1899
        %v2056 = vpop.f32.mrf.mxu0
        %v2057 = vadd.f32 %v1949, %v2056
        %v2058 = vpop.f32.mrf.mxu0
        %v2059 = vadd.f32 %v1949, %v2058
        %2060 = vmatmul.bf16.gmra.mxu0 %v1901
        %v2061 = vpop.f32.mrf.mxu0
        %v2062 = vadd.f32 %v1949, %v2061
        %v2063 = vpop.f32.mrf.mxu0
        %v2064 = vadd.f32 %v1949, %v2063
        %2065 = vmatmul.bf16.gmra.mxu0 %v1903
        %v2066 = vpop.f32.mrf.mxu0
        %v2067 = vadd.f32 %v1949, %v2066
        %v2068 = vpop.f32.mrf.mxu0
        %v2069 = vadd.f32 %v1949, %v2068
        %2070 = vmatmul.bf16.gmra.mxu0 %v1905
        %v2071 = vpop.f32.mrf.mxu0
        %v2072 = vadd.f32 %v1949, %v2071
        %v2073 = vpop.f32.mrf.mxu0
        %v2074 = vadd.f32 %v1949, %v2073
        %2075 = vmatmul.bf16.gmra.mxu0 %v1907
        %v2076 = vpop.f32.mrf.mxu0
        %v2077 = vadd.f32 %v1949, %v2076
        %v2078 = vpop.f32.mrf.mxu0
        %v2079 = vadd.f32 %v1949, %v2078
        %2080 = vmatmul.bf16.gmra.mxu0 %v1909
        %v2081 = vpop.f32.mrf.mxu0
        %v2082 = vadd.f32 %v1949, %v2081
        %v2083 = vpop.f32.mrf.mxu0
        %v2084 = vadd.f32 %v1949, %v2083
        %2085 = vmatmul.bf16.gmra.mxu0 %v1911
        %v2086 = vpop.f32.mrf.mxu0
        %v2087 = vadd.f32 %v1949, %v2086
        %v2088 = vpop.f32.mrf.mxu0
        %v2089 = vadd.f32 %v1949, %v2088
        %2090 = vmatmul.bf16.gmra.mxu0 %v1913
        %v2091 = vpop.f32.mrf.mxu0
        %v2092 = vadd.f32 %v1949, %v2091
        %v2093 = vpop.f32.mrf.mxu0
        %v2094 = vadd.f32 %v1949, %v2093
        %2095 = vdwg.mxu0
        %2096 = vmatpush.bf16.msra.mxu0 %v2030
        %2097 = vmatpush.bf16.msra.mxu0 %v2029
        %2098 = vmatpush.bf16.msra.mxu0 %v2028
        %2099 = vmatpush.bf16.msra.mxu0 %v2027
        %2100 = vmatpush.bf16.msra.mxu0 %v2026
        %2101 = vmatpush.bf16.msra.mxu0 %v2025
        %2102 = vmatpush.bf16.msra.mxu0 %v2024
        %2103 = vmatpush.bf16.msra.mxu0 %v2023
        %2104 = vmatmul.bf16.gmra.mxu0 %v1900
        %v2105 = vpop.f32.mrf.mxu0
        %v2106 = vadd.f32 %v2057, %v2105
        %v2107 = vpop.f32.mrf.mxu0
        %v2108 = vadd.f32 %v2059, %v2107
        %2109 = vmatmul.bf16.gmra.mxu0 %v1902
        %v2110 = vpop.f32.mrf.mxu0
        %v2111 = vadd.f32 %v2062, %v2110
        %v2112 = vpop.f32.mrf.mxu0
        %v2113 = vadd.f32 %v2064, %v2112
        %2114 = vmatmul.bf16.gmra.mxu0 %v1904
        %v2115 = vpop.f32.mrf.mxu0
        %v2116 = vadd.f32 %v2067, %v2115
        %v2117 = vpop.f32.mrf.mxu0
        %v2118 = vadd.f32 %v2069, %v2117
        %2119 = vmatmul.bf16.gmra.mxu0 %v1906
        %v2120 = vpop.f32.mrf.mxu0
        %v2121 = vadd.f32 %v2072, %v2120
        %v2122 = vpop.f32.mrf.mxu0
        %v2123 = vadd.f32 %v2074, %v2122
        %2124 = vmatmul.bf16.gmra.mxu0 %v1908
        %v2125 = vpop.f32.mrf.mxu0
        %v2126 = vadd.f32 %v2077, %v2125
        %v2127 = vpop.f32.mrf.mxu0
        %v2128 = vadd.f32 %v2079, %v2127
        %2129 = vmatmul.bf16.gmra.mxu0 %v1910
        %v2130 = vpop.f32.mrf.mxu0
        %v2131 = vadd.f32 %v2082, %v2130
        %v2132 = vpop.f32.mrf.mxu0
        %v2133 = vadd.f32 %v2084, %v2132
        %2134 = vmatmul.bf16.gmra.mxu0 %v1912
        %v2135 = vpop.f32.mrf.mxu0
        %v2136 = vadd.f32 %v2087, %v2135
        %v2137 = vpop.f32.mrf.mxu0
        %v2138 = vadd.f32 %v2089, %v2137
        %2139 = vmatmul.bf16.gmra.mxu0 %v1914
        %v2140 = vpop.f32.mrf.mxu0
        %v2141 = vadd.f32 %v2092, %v2140
        %v2142 = vpop.f32.mrf.mxu0
        %v2143 = vadd.f32 %v2094, %v2142
        %2144 = vdwg.mxu0
        %v2145 = vmax.f32 %v2106, 0.0
        %v2146 = vmax.f32 %v2108, 0.0
        %v2147 = vmax.f32 %v2111, 0.0
        %v2148 = vmax.f32 %v2113, 0.0
        %v2149 = vmax.f32 %v2116, 0.0
        %v2150 = vmax.f32 %v2118, 0.0
        %v2151 = vmax.f32 %v2121, 0.0
        %v2152 = vmax.f32 %v2123, 0.0
        %v2153 = vmax.f32 %v2126, 0.0
        %v2154 = vmax.f32 %v2128, 0.0
        %v2155 = vmax.f32 %v2131, 0.0
        %v2156 = vmax.f32 %v2133, 0.0
        %v2157 = vmax.f32 %v2136, 0.0
        %v2158 = vmax.f32 %v2138, 0.0
        %v2159 = vmax.f32 %v2141, 0.0
        %v2160 = vmax.f32 %v2143, 0.0
        %v2161 = vld [vmem:[#allocation14] sm:$0x1]
        %v2163 = vperm.slane %v2161, 0
        %v2165 = vmul.f32 %v2145, %v2163
        %v2166 = vmul.f32 %v2146, %v2163
        %v2167 = vmul.f32 %v2147, %v2163
        %v2168 = vmul.f32 %v2148, %v2163
        %v2169 = vmul.f32 %v2149, %v2163
        %v2170 = vmul.f32 %v2150, %v2163
        %v2171 = vmul.f32 %v2151, %v2163
        %v2172 = vmul.f32 %v2152, %v2163
        %v2173 = vmul.f32 %v2153, %v2163
        %v2174 = vmul.f32 %v2154, %v2163
        %v2175 = vmul.f32 %v2155, %v2163
        %v2176 = vmul.f32 %v2156, %v2163
        %v2177 = vmul.f32 %v2157, %v2163
        %v2178 = vmul.f32 %v2158, %v2163
        %v2179 = vmul.f32 %v2159, %v2163
        %v2180 = vmul.f32 %v2160, %v2163
        %2181 = vadd.xlane.f32.xlu0 %v2165
        %v2182 = vpop.xlane.xlu0 %2181
        %2183 = vadd.xlane.f32.xlu0 %v2166
        %v2184 = vpop.xlane.xlu0 %2183
        %2185 = vadd.xlane.f32.xlu0 %v2167
        %v2186 = vpop.xlane.xlu0 %2185
        %2187 = vadd.xlane.f32.xlu0 %v2168
        %v2188 = vpop.xlane.xlu0 %2187
        %2189 = vadd.xlane.f32.xlu0 %v2169
        %v2190 = vpop.xlane.xlu0 %2189
        %2191 = vadd.xlane.f32.xlu0 %v2170
        %v2192 = vpop.xlane.xlu0 %2191
        %2193 = vadd.xlane.f32.xlu0 %v2171
        %v2194 = vpop.xlane.xlu0 %2193
        %2195 = vadd.xlane.f32.xlu0 %v2172
        %v2196 = vpop.xlane.xlu0 %2195
        %2197 = vadd.xlane.f32.xlu0 %v2173
        %v2198 = vpop.xlane.xlu0 %2197
        %2199 = vadd.xlane.f32.xlu0 %v2174
        %v2200 = vpop.xlane.xlu0 %2199
        %2201 = vadd.xlane.f32.xlu0 %v2175
        %v2202 = vpop.xlane.xlu0 %2201
        %2203 = vadd.xlane.f32.xlu0 %v2176
        %v2204 = vpop.xlane.xlu0 %2203
        %2205 = vadd.xlane.f32.xlu0 %v2177
        %v2206 = vpop.xlane.xlu0 %2205
        %2207 = vadd.xlane.f32.xlu0 %v2178
        %v2208 = vpop.xlane.xlu0 %2207
        %2209 = vadd.xlane.f32.xlu0 %v2179
        %v2210 = vpop.xlane.xlu0 %2209
        %2211 = vadd.xlane.f32.xlu0 %v2180
        %v2212 = vpop.xlane.xlu0 %2211
        %v2213 = vld [vmem:[#allocation2] sm:$0x1]
        %v2215 = vperm.slane %v2213, 0
        %v2217 = vadd.f32 %v2182, %v2215
        %v2218 = vadd.f32 %v2184, %v2215
        %v2219 = vadd.f32 %v2186, %v2215
        %v2220 = vadd.f32 %v2188, %v2215
        %v2221 = vadd.f32 %v2190, %v2215
        %v2222 = vadd.f32 %v2192, %v2215
        %v2223 = vadd.f32 %v2194, %v2215
        %v2224 = vadd.f32 %v2196, %v2215
        %v2225 = vadd.f32 %v2198, %v2215
        %v2226 = vadd.f32 %v2200, %v2215
        %v2227 = vadd.f32 %v2202, %v2215
        %v2228 = vadd.f32 %v2204, %v2215
        %v2229 = vadd.f32 %v2206, %v2215
        %v2230 = vadd.f32 %v2208, %v2215
        %v2231 = vadd.f32 %v2210, %v2215
        %v2232 = vadd.f32 %v2212, %v2215
        %v2233 = vxor.u32 %v2217, 2147483648
        %v2234 = vxor.u32 %v2218, 2147483648
        %v2235 = vxor.u32 %v2219, 2147483648
        %v2236 = vxor.u32 %v2220, 2147483648
        %v2237 = vxor.u32 %v2221, 2147483648
        %v2238 = vxor.u32 %v2222, 2147483648
        %v2239 = vxor.u32 %v2223, 2147483648
        %v2240 = vxor.u32 %v2224, 2147483648
        %v2241 = vxor.u32 %v2225, 2147483648
        %v2242 = vxor.u32 %v2226, 2147483648
        %v2243 = vxor.u32 %v2227, 2147483648
        %v2244 = vxor.u32 %v2228, 2147483648
        %v2245 = vxor.u32 %v2229, 2147483648
        %v2246 = vxor.u32 %v2230, 2147483648
        %v2247 = vxor.u32 %v2231, 2147483648
        %v2248 = vxor.u32 %v2232, 2147483648
        %v2249 = vmul.f32 %v2233, 1.442695
        %v2250 = vpow.pop %v2249
        %v2251 = vmul.f32 %v2234, 1.442695
        %v2252 = vpow.pop %v2251
        %v2253 = vmul.f32 %v2235, 1.442695
        %v2254 = vpow.pop %v2253
        %v2255 = vmul.f32 %v2236, 1.442695
        %v2256 = vpow.pop %v2255
        %v2257 = vmul.f32 %v2237, 1.442695
        %v2258 = vpow.pop %v2257
        %v2259 = vmul.f32 %v2238, 1.442695
        %v2260 = vpow.pop %v2259
        %v2261 = vmul.f32 %v2239, 1.442695
        %v2262 = vpow.pop %v2261
        %v2263 = vmul.f32 %v2240, 1.442695
        %v2264 = vpow.pop %v2263
        %v2265 = vmul.f32 %v2241, 1.442695
        %v2266 = vpow.pop %v2265
        %v2267 = vmul.f32 %v2242, 1.442695
        %v2268 = vpow.pop %v2267
        %v2269 = vmul.f32 %v2243, 1.442695
        %v2270 = vpow.pop %v2269
        %v2271 = vmul.f32 %v2244, 1.442695
        %v2272 = vpow.pop %v2271
        %v2273 = vmul.f32 %v2245, 1.442695
        %v2274 = vpow.pop %v2273
        %v2275 = vmul.f32 %v2246, 1.442695
        %v2276 = vpow.pop %v2275
        %v2277 = vmul.f32 %v2247, 1.442695
        %v2278 = vpow.pop %v2277
        %v2279 = vmul.f32 %v2248, 1.442695
        %v2280 = vpow.pop %v2279
        %v2281 = vadd.f32 %v2250, 1.0
        %v2282 = vadd.f32 %v2252, 1.0
        %v2283 = vadd.f32 %v2254, 1.0
        %v2284 = vadd.f32 %v2256, 1.0
        %v2285 = vadd.f32 %v2258, 1.0
        %v2286 = vadd.f32 %v2260, 1.0
        %v2287 = vadd.f32 %v2262, 1.0
        %v2288 = vadd.f32 %v2264, 1.0
        %v2289 = vadd.f32 %v2266, 1.0
        %v2290 = vadd.f32 %v2268, 1.0
        %v2291 = vadd.f32 %v2270, 1.0
        %v2292 = vadd.f32 %v2272, 1.0
        %v2293 = vadd.f32 %v2274, 1.0
        %v2294 = vadd.f32 %v2276, 1.0
        %v2295 = vadd.f32 %v2278, 1.0
        %v2296 = vadd.f32 %v2280, 1.0
        %v2297 = vrcp.pop %v2281
        %v2298 = vmul.f32 %v2281, %v2297
        %v2299 = vsub.f32 1.0, %v2298
        %v2300 = vmul.f32 %v2297, %v2299
        %v2301 = vadd.f32 %v2297, %v2300
        %vm2302 = vweird.f32 %v2281
        %vm2303 = vweird.f32 %v2297
        %vm2304 = vmor %vm2302, %vm2303
        %v2305 = vsel %vm2304, %v2297, %v2301
        %v2306 = vand.u32 2147483647, %v2281
        %vm2307 = vcmp.eq.f32.partialorder %v2306, 8.507059e+37
        %v2308 = vand.u32 %v2281, 2147483648
        %v2309 = vor.u32 1.1754944e-38, %v2308
        %v2310 = vsel %vm2307, %v2309, %v2305
        %v2311 = vmul.f32 1.0, %v2310
        %v2312 = vrcp.pop %v2282
        %v2313 = vmul.f32 %v2282, %v2312
        %v2314 = vsub.f32 1.0, %v2313
        %v2315 = vmul.f32 %v2312, %v2314
        %v2316 = vadd.f32 %v2312, %v2315
        %vm2317 = vweird.f32 %v2282
        %vm2318 = vweird.f32 %v2312
        %vm2319 = vmor %vm2317, %vm2318
        %v2320 = vsel %vm2319, %v2312, %v2316
        %v2321 = vand.u32 2147483647, %v2282
        %vm2322 = vcmp.eq.f32.partialorder %v2321, 8.507059e+37
        %v2323 = vand.u32 %v2282, 2147483648
        %v2324 = vor.u32 1.1754944e-38, %v2323
        %v2325 = vsel %vm2322, %v2324, %v2320
        %v2326 = vmul.f32 1.0, %v2325
        %v2327 = vrcp.pop %v2283
        %v2328 = vmul.f32 %v2283, %v2327
        %v2329 = vsub.f32 1.0, %v2328
        %v2330 = vmul.f32 %v2327, %v2329
        %v2331 = vadd.f32 %v2327, %v2330
        %vm2332 = vweird.f32 %v2283
        %vm2333 = vweird.f32 %v2327
        %vm2334 = vmor %vm2332, %vm2333
        %v2335 = vsel %vm2334, %v2327, %v2331
        %v2336 = vand.u32 2147483647, %v2283
        %vm2337 = vcmp.eq.f32.partialorder %v2336, 8.507059e+37
        %v2338 = vand.u32 %v2283, 2147483648
        %v2339 = vor.u32 1.1754944e-38, %v2338
        %v2340 = vsel %vm2337, %v2339, %v2335
        %v2341 = vmul.f32 1.0, %v2340
        %v2342 = vrcp.pop %v2284
        %v2343 = vmul.f32 %v2284, %v2342
        %v2344 = vsub.f32 1.0, %v2343
        %v2345 = vmul.f32 %v2342, %v2344
        %v2346 = vadd.f32 %v2342, %v2345
        %vm2347 = vweird.f32 %v2284
        %vm2348 = vweird.f32 %v2342
        %vm2349 = vmor %vm2347, %vm2348
        %v2350 = vsel %vm2349, %v2342, %v2346
        %v2351 = vand.u32 2147483647, %v2284
        %vm2352 = vcmp.eq.f32.partialorder %v2351, 8.507059e+37
        %v2353 = vand.u32 %v2284, 2147483648
        %v2354 = vor.u32 1.1754944e-38, %v2353
        %v2355 = vsel %vm2352, %v2354, %v2350
        %v2356 = vmul.f32 1.0, %v2355
        %v2357 = vrcp.pop %v2285
        %v2358 = vmul.f32 %v2285, %v2357
        %v2359 = vsub.f32 1.0, %v2358
        %v2360 = vmul.f32 %v2357, %v2359
        %v2361 = vadd.f32 %v2357, %v2360
        %vm2362 = vweird.f32 %v2285
        %vm2363 = vweird.f32 %v2357
        %vm2364 = vmor %vm2362, %vm2363
        %v2365 = vsel %vm2364, %v2357, %v2361
        %v2366 = vand.u32 2147483647, %v2285
        %vm2367 = vcmp.eq.f32.partialorder %v2366, 8.507059e+37
        %v2368 = vand.u32 %v2285, 2147483648
        %v2369 = vor.u32 1.1754944e-38, %v2368
        %v2370 = vsel %vm2367, %v2369, %v2365
        %v2371 = vmul.f32 1.0, %v2370
        %v2372 = vrcp.pop %v2286
        %v2373 = vmul.f32 %v2286, %v2372
        %v2374 = vsub.f32 1.0, %v2373
        %v2375 = vmul.f32 %v2372, %v2374
        %v2376 = vadd.f32 %v2372, %v2375
        %vm2377 = vweird.f32 %v2286
        %vm2378 = vweird.f32 %v2372
        %vm2379 = vmor %vm2377, %vm2378
        %v2380 = vsel %vm2379, %v2372, %v2376
        %v2381 = vand.u32 2147483647, %v2286
        %vm2382 = vcmp.eq.f32.partialorder %v2381, 8.507059e+37
        %v2383 = vand.u32 %v2286, 2147483648
        %v2384 = vor.u32 1.1754944e-38, %v2383
        %v2385 = vsel %vm2382, %v2384, %v2380
        %v2386 = vmul.f32 1.0, %v2385
        %v2387 = vrcp.pop %v2287
        %v2388 = vmul.f32 %v2287, %v2387
        %v2389 = vsub.f32 1.0, %v2388
        %v2390 = vmul.f32 %v2387, %v2389
        %v2391 = vadd.f32 %v2387, %v2390
        %vm2392 = vweird.f32 %v2287
        %vm2393 = vweird.f32 %v2387
        %vm2394 = vmor %vm2392, %vm2393
        %v2395 = vsel %vm2394, %v2387, %v2391
        %v2396 = vand.u32 2147483647, %v2287
        %vm2397 = vcmp.eq.f32.partialorder %v2396, 8.507059e+37
        %v2398 = vand.u32 %v2287, 2147483648
        %v2399 = vor.u32 1.1754944e-38, %v2398
        %v2400 = vsel %vm2397, %v2399, %v2395
        %v2401 = vmul.f32 1.0, %v2400
        %v2402 = vrcp.pop %v2288
        %v2403 = vmul.f32 %v2288, %v2402
        %v2404 = vsub.f32 1.0, %v2403
        %v2405 = vmul.f32 %v2402, %v2404
        %v2406 = vadd.f32 %v2402, %v2405
        %vm2407 = vweird.f32 %v2288
        %vm2408 = vweird.f32 %v2402
        %vm2409 = vmor %vm2407, %vm2408
        %v2410 = vsel %vm2409, %v2402, %v2406
        %v2411 = vand.u32 2147483647, %v2288
        %vm2412 = vcmp.eq.f32.partialorder %v2411, 8.507059e+37
        %v2413 = vand.u32 %v2288, 2147483648
        %v2414 = vor.u32 1.1754944e-38, %v2413
        %v2415 = vsel %vm2412, %v2414, %v2410
        %v2416 = vmul.f32 1.0, %v2415
        %v2417 = vrcp.pop %v2289
        %v2418 = vmul.f32 %v2289, %v2417
        %v2419 = vsub.f32 1.0, %v2418
        %v2420 = vmul.f32 %v2417, %v2419
        %v2421 = vadd.f32 %v2417, %v2420
        %vm2422 = vweird.f32 %v2289
        %vm2423 = vweird.f32 %v2417
        %vm2424 = vmor %vm2422, %vm2423
        %v2425 = vsel %vm2424, %v2417, %v2421
        %v2426 = vand.u32 2147483647, %v2289
        %vm2427 = vcmp.eq.f32.partialorder %v2426, 8.507059e+37
        %v2428 = vand.u32 %v2289, 2147483648
        %v2429 = vor.u32 1.1754944e-38, %v2428
        %v2430 = vsel %vm2427, %v2429, %v2425
        %v2431 = vmul.f32 1.0, %v2430
        %v2432 = vrcp.pop %v2290
        %v2433 = vmul.f32 %v2290, %v2432
        %v2434 = vsub.f32 1.0, %v2433
        %v2435 = vmul.f32 %v2432, %v2434
        %v2436 = vadd.f32 %v2432, %v2435
        %vm2437 = vweird.f32 %v2290
        %vm2438 = vweird.f32 %v2432
        %vm2439 = vmor %vm2437, %vm2438
        %v2440 = vsel %vm2439, %v2432, %v2436
        %v2441 = vand.u32 2147483647, %v2290
        %vm2442 = vcmp.eq.f32.partialorder %v2441, 8.507059e+37
        %v2443 = vand.u32 %v2290, 2147483648
        %v2444 = vor.u32 1.1754944e-38, %v2443
        %v2445 = vsel %vm2442, %v2444, %v2440
        %v2446 = vmul.f32 1.0, %v2445
        %v2447 = vrcp.pop %v2291
        %v2448 = vmul.f32 %v2291, %v2447
        %v2449 = vsub.f32 1.0, %v2448
        %v2450 = vmul.f32 %v2447, %v2449
        %v2451 = vadd.f32 %v2447, %v2450
        %vm2452 = vweird.f32 %v2291
        %vm2453 = vweird.f32 %v2447
        %vm2454 = vmor %vm2452, %vm2453
        %v2455 = vsel %vm2454, %v2447, %v2451
        %v2456 = vand.u32 2147483647, %v2291
        %vm2457 = vcmp.eq.f32.partialorder %v2456, 8.507059e+37
        %v2458 = vand.u32 %v2291, 2147483648
        %v2459 = vor.u32 1.1754944e-38, %v2458
        %v2460 = vsel %vm2457, %v2459, %v2455
        %v2461 = vmul.f32 1.0, %v2460
        %v2462 = vrcp.pop %v2292
        %v2463 = vmul.f32 %v2292, %v2462
        %v2464 = vsub.f32 1.0, %v2463
        %v2465 = vmul.f32 %v2462, %v2464
        %v2466 = vadd.f32 %v2462, %v2465
        %vm2467 = vweird.f32 %v2292
        %vm2468 = vweird.f32 %v2462
        %vm2469 = vmor %vm2467, %vm2468
        %v2470 = vsel %vm2469, %v2462, %v2466
        %v2471 = vand.u32 2147483647, %v2292
        %vm2472 = vcmp.eq.f32.partialorder %v2471, 8.507059e+37
        %v2473 = vand.u32 %v2292, 2147483648
        %v2474 = vor.u32 1.1754944e-38, %v2473
        %v2475 = vsel %vm2472, %v2474, %v2470
        %v2476 = vmul.f32 1.0, %v2475
        %v2477 = vrcp.pop %v2293
        %v2478 = vmul.f32 %v2293, %v2477
        %v2479 = vsub.f32 1.0, %v2478
        %v2480 = vmul.f32 %v2477, %v2479
        %v2481 = vadd.f32 %v2477, %v2480
        %vm2482 = vweird.f32 %v2293
        %vm2483 = vweird.f32 %v2477
        %vm2484 = vmor %vm2482, %vm2483
        %v2485 = vsel %vm2484, %v2477, %v2481
        %v2486 = vand.u32 2147483647, %v2293
        %vm2487 = vcmp.eq.f32.partialorder %v2486, 8.507059e+37
        %v2488 = vand.u32 %v2293, 2147483648
        %v2489 = vor.u32 1.1754944e-38, %v2488
        %v2490 = vsel %vm2487, %v2489, %v2485
        %v2491 = vmul.f32 1.0, %v2490
        %v2492 = vrcp.pop %v2294
        %v2493 = vmul.f32 %v2294, %v2492
        %v2494 = vsub.f32 1.0, %v2493
        %v2495 = vmul.f32 %v2492, %v2494
        %v2496 = vadd.f32 %v2492, %v2495
        %vm2497 = vweird.f32 %v2294
        %vm2498 = vweird.f32 %v2492
        %vm2499 = vmor %vm2497, %vm2498
        %v2500 = vsel %vm2499, %v2492, %v2496
        %v2501 = vand.u32 2147483647, %v2294
        %vm2502 = vcmp.eq.f32.partialorder %v2501, 8.507059e+37
        %v2503 = vand.u32 %v2294, 2147483648
        %v2504 = vor.u32 1.1754944e-38, %v2503
        %v2505 = vsel %vm2502, %v2504, %v2500
        %v2506 = vmul.f32 1.0, %v2505
        %v2507 = vrcp.pop %v2295
        %v2508 = vmul.f32 %v2295, %v2507
        %v2509 = vsub.f32 1.0, %v2508
        %v2510 = vmul.f32 %v2507, %v2509
        %v2511 = vadd.f32 %v2507, %v2510
        %vm2512 = vweird.f32 %v2295
        %vm2513 = vweird.f32 %v2507
        %vm2514 = vmor %vm2512, %vm2513
        %v2515 = vsel %vm2514, %v2507, %v2511
        %v2516 = vand.u32 2147483647, %v2295
        %vm2517 = vcmp.eq.f32.partialorder %v2516, 8.507059e+37
        %v2518 = vand.u32 %v2295, 2147483648
        %v2519 = vor.u32 1.1754944e-38, %v2518
        %v2520 = vsel %vm2517, %v2519, %v2515
        %v2521 = vmul.f32 1.0, %v2520
        %v2522 = vrcp.pop %v2296
        %v2523 = vmul.f32 %v2296, %v2522
        %v2524 = vsub.f32 1.0, %v2523
        %v2525 = vmul.f32 %v2522, %v2524
        %v2526 = vadd.f32 %v2522, %v2525
        %vm2527 = vweird.f32 %v2296
        %vm2528 = vweird.f32 %v2522
        %vm2529 = vmor %vm2527, %vm2528
        %v2530 = vsel %vm2529, %v2522, %v2526
        %v2531 = vand.u32 2147483647, %v2296
        %vm2532 = vcmp.eq.f32.partialorder %v2531, 8.507059e+37
        %v2533 = vand.u32 %v2296, 2147483648
        %v2534 = vor.u32 1.1754944e-38, %v2533
        %v2535 = vsel %vm2532, %v2534, %v2530
        %v2536 = vmul.f32 1.0, %v2535
        %vm2537 = vcmask 7168
        %2538 = vst.msk [vmem:[%s503] sm:$0xff] %vm2537, %v2311
        %2539 = vst.msk [vmem:[%s503 + $0x8] sm:$0xff] %vm2537, %v2326
        %2540 = vst.msk [vmem:[%s503 + $0x10] sm:$0xff] %vm2537, %v2341
        %2541 = vst.msk [vmem:[%s503 + $0x18] sm:$0xff] %vm2537, %v2356
        %2542 = vst.msk [vmem:[%s503 + $0x20] sm:$0xff] %vm2537, %v2371
        %2543 = vst.msk [vmem:[%s503 + $0x28] sm:$0xff] %vm2537, %v2386
        %2544 = vst.msk [vmem:[%s503 + $0x30] sm:$0xff] %vm2537, %v2401
        %2545 = vst.msk [vmem:[%s503 + $0x38] sm:$0xff] %vm2537, %v2416
        %2546 = vst.msk [vmem:[%s503 + $0x40] sm:$0xff] %vm2537, %v2431
        %2547 = vst.msk [vmem:[%s503 + $0x48] sm:$0xff] %vm2537, %v2446
        %2548 = vst.msk [vmem:[%s503 + $0x50] sm:$0xff] %vm2537, %v2461
        %2549 = vst.msk [vmem:[%s503 + $0x58] sm:$0xff] %vm2537, %v2476
        %2550 = vst.msk [vmem:[%s503 + $0x60] sm:$0xff] %vm2537, %v2491
        %2551 = vst.msk [vmem:[%s503 + $0x68] sm:$0xff] %vm2537, %v2506
        %2552 = vst.msk [vmem:[%s503 + $0x70] sm:$0xff] %vm2537, %v2521
        %2553 = vst.msk [vmem:[%s503 + $0x78] sm:$0xff] %vm2537, %v2536
        %s2554 = sand.u32 %s238, 1
        %s2555 = sand.u32 %s238, 1
        %s2556 = smul.addr %s2555, 128
        %s2557 = scalar_lea.vmem [#allocation16], %s2556
        // Predicated region
        $region89: #{tpu_custom_call.1} parent=55 // pred_check
          %p2558 = pneg %p248
        $region90: #{tpu_custom_call.1} parent=55 // pred_check_branch
          %2560 = sbr.rel (%p2558) target = $region92
        $region91: #{tpu_custom_call.1} parent=55 // pred_region
          %s2561 = smul.u32 16, %s31
          %s2562 = ssub.s32 125, %s2561
          %p2563 = scmp.lt.s32.totalorder %s2562, 16
          %s2564 = scalar_select %p2563, %s2562, 16
          %s2565 = smul.u32 8, %s2564
          %p2566 = scmp.ne.s32.totalorder 0, %s2565
          %s2567 = smul.addr %s2561, 8
          %s2568 = scalar_lea.vmem %s9, %s2567
          // Predicated region
          $region93: #{tpu_custom_call.1} parent=91 // pred_check
            %p2569 = pneg %p2566
          $region94: #{tpu_custom_call.1} parent=91 // pred_check_branch
            %2571 = sbr.rel (%p2569) target = $region96
          $region95: #{tpu_custom_call.1} parent=91 // pred_region
            // Predicated region
            $region97: #{tpu_custom_call.1} parent=95 // pred_check
              _
            $region98: #{tpu_custom_call.1} parent=95 // pred_check_branch
              %2573 = sbr.rel (0) target = $region100
            $region99: #{tpu_custom_call.1} parent=95 // pred_region
              // Predicated region
              $region119: #{tpu_custom_call.1} parent=99 // pred_check
                _
              $region120: #{tpu_custom_call.1} parent=99 // pred_check_branch
                %2653 = sbr.rel (0) target = $region122
              $region121: #{tpu_custom_call.1} parent=99 // pred_region
                %s2654 = sshrl.u32 %s2564, 4
                // While loop
                $region123: #{tpu_custom_call.1} parent=121 // loop_pre_header
                  _
                $region124: #{tpu_custom_call.1} parent=121 // loop_header
                  %s2656 = sphi 0, %s2658
                  %p2657 = scmp.ge.s32.totalorder %s2656, %s2654
                  %s2661 = sphi 0, %s2698
                  %s2662 = sphi %s2557, %s2701
                  %s2663 = sphi %s2568, %s2702
                $region125: #{tpu_custom_call.1} parent=121 // loop_header_branch
                  %2660 = sbr.rel (%p2657) target = $region129
                $region126: #{tpu_custom_call.1} parent=121 // loop_body
                  %v2664 = vld [vmem:[%s2662] sm:$0xff]
                  %2665 = vst [vmem:[%s2663] sm:$0xff] %v2664
                  %v2666 = vld [vmem:[%s2662 + $0x8] sm:$0xff]
                  %2667 = vst [vmem:[%s2663 + $0x8] sm:$0xff] %v2666
                  %v2668 = vld [vmem:[%s2662 + $0x10] sm:$0xff]
                  %2669 = vst [vmem:[%s2663 + $0x10] sm:$0xff] %v2668
                  %v2670 = vld [vmem:[%s2662 + $0x18] sm:$0xff]
                  %2671 = vst [vmem:[%s2663 + $0x18] sm:$0xff] %v2670
                  %v2672 = vld [vmem:[%s2662 + $0x20] sm:$0xff]
                  %2673 = vst [vmem:[%s2663 + $0x20] sm:$0xff] %v2672
                  %v2674 = vld [vmem:[%s2662 + $0x28] sm:$0xff]
                  %2675 = vst [vmem:[%s2663 + $0x28] sm:$0xff] %v2674
                  %v2676 = vld [vmem:[%s2662 + $0x30] sm:$0xff]
                  %2677 = vst [vmem:[%s2663 + $0x30] sm:$0xff] %v2676
                  %v2678 = vld [vmem:[%s2662 + $0x38] sm:$0xff]
                  %2679 = vst [vmem:[%s2663 + $0x38] sm:$0xff] %v2678
                  %v2680 = vld [vmem:[%s2662 + $0x40] sm:$0xff]
                  %2681 = vst [vmem:[%s2663 + $0x40] sm:$0xff] %v2680
                  %v2682 = vld [vmem:[%s2662 + $0x48] sm:$0xff]
                  %2683 = vst [vmem:[%s2663 + $0x48] sm:$0xff] %v2682
                  %v2684 = vld [vmem:[%s2662 + $0x50] sm:$0xff]
                  %2685 = vst [vmem:[%s2663 + $0x50] sm:$0xff] %v2684
                  %v2686 = vld [vmem:[%s2662 + $0x58] sm:$0xff]
                  %2687 = vst [vmem:[%s2663 + $0x58] sm:$0xff] %v2686
                  %v2688 = vld [vmem:[%s2662 + $0x60] sm:$0xff]
                  %2689 = vst [vmem:[%s2663 + $0x60] sm:$0xff] %v2688
                  %v2690 = vld [vmem:[%s2662 + $0x68] sm:$0xff]
                  %2691 = vst [vmem:[%s2663 + $0x68] sm:$0xff] %v2690
                  %v2692 = vld [vmem:[%s2662 + $0x70] sm:$0xff]
                  %2693 = vst [vmem:[%s2663 + $0x70] sm:$0xff] %v2692
                  %v2694 = vld [vmem:[%s2662 + $0x78] sm:$0xff]
                  %2695 = vst [vmem:[%s2663 + $0x78] sm:$0xff] %v2694
                  %s2696 = sadd.s32 1, %s2661
                  %p2697 = scmp.ge.s32.totalorder %s2696, %s2654
                  %s2698 = scalar_select %p2697, 0, %s2696
                  %s2699 = smul.u32 %s2698, 128
                  %s2700 = smul.u32 %s2698, 128
                  %s2701 = scalar_lea.vmem %s2557, %s2699 [#allocation16]
                  %s2702 = scalar_lea.vmem %s2568, %s2700
                $region127: #{tpu_custom_call.1} parent=121 // loop_footer
                  %s2658 = sadd.s32 %s2656, 1
                $region128: #{tpu_custom_call.1} parent=121 // loop_footer_branch
                  %2655 = sbr.rel target = $region124
                $region129: #{tpu_custom_call.1} parent=121 // loop_exit
                  _
                %s2703 = sshrl.u32 %s2564, 4
                %s2704 = sand.u32 %s2564, 15
                %s2705 = smul.u32 %s2703, 16
                %s2706 = smul.u32 8, %s2705
                %s2707 = scalar_lea.vmem %s2557, %s2706 [#allocation16]
                %s2708 = smul.u32 8, %s2705
                %s2709 = scalar_lea.vmem %s2568, %s2708
                // While loop
                $region130: #{tpu_custom_call.1} parent=121 // loop_pre_header
                  _
                $region131: #{tpu_custom_call.1} parent=121 // loop_header
                  %s2711 = sphi 0, %s2713
                  %p2712 = scmp.ge.s32.totalorder %s2711, %s2704
                  %s2716 = sphi 0, %s2723
                  %s2717 = sphi %s2707, %s2726
                  %s2718 = sphi %s2709, %s2727
                $region132: #{tpu_custom_call.1} parent=121 // loop_header_branch
                  %2715 = sbr.rel (%p2712) target = $region136
                $region133: #{tpu_custom_call.1} parent=121 // loop_body
                  %v2719 = vld [vmem:[%s2717] sm:$0xff]
                  %2720 = vst [vmem:[%s2718] sm:$0xff] %v2719
                  %s2721 = sadd.s32 1, %s2716
                  %p2722 = scmp.ge.s32.totalorder %s2721, %s2704
                  %s2723 = scalar_select %p2722, 0, %s2721
                  %s2724 = smul.u32 %s2723, 8
                  %s2725 = smul.u32 %s2723, 8
                  %s2726 = scalar_lea.vmem %s2707, %s2724 [#allocation16]
                  %s2727 = scalar_lea.vmem %s2709, %s2725
                $region134: #{tpu_custom_call.1} parent=121 // loop_footer
                  %s2713 = sadd.s32 %s2711, 1
                $region135: #{tpu_custom_call.1} parent=121 // loop_footer_branch
                  %2710 = sbr.rel target = $region131
                $region136: #{tpu_custom_call.1} parent=121 // loop_exit
                  _
              $region122: #{tpu_custom_call.1} parent=99 // pred_fallthru
                _
              // Predicated region
              $region137: #{tpu_custom_call.1} parent=99 // pred_check
                _
              $region138: #{tpu_custom_call.1} parent=99 // pred_check_branch
                %2729 = sbr.rel target = $region140
              $region139: #{tpu_custom_call.1} parent=99 // pred_region
                _
              $region140: #{tpu_custom_call.1} parent=99 // pred_fallthru
                _
            $region100: #{tpu_custom_call.1} parent=95 // pred_fallthru
              _
            // Predicated region
            $region101: #{tpu_custom_call.1} parent=95 // pred_check
              _
            $region102: #{tpu_custom_call.1} parent=95 // pred_check_branch
              %2575 = sbr.rel target = $region104
            $region103: #{tpu_custom_call.1} parent=95 // pred_region
              %s2577 = ssub.s32 256, 1
              %s2578 = sshrl.u32 %s2564, 4
              // While loop
              $region105: #{tpu_custom_call.1} parent=103 // loop_pre_header
                _
              $region106: #{tpu_custom_call.1} parent=103 // loop_header
                %s2580 = sphi 0, %s2582
                %p2581 = scmp.ge.s32.totalorder %s2580, %s2578
                %s2585 = sphi 0, %s2622
                %s2586 = sphi %s2557, %s2625
                %s2587 = sphi %s2568, %s2626
              $region107: #{tpu_custom_call.1} parent=103 // loop_header_branch
                %2584 = sbr.rel (%p2581) target = $region111
              $region108: #{tpu_custom_call.1} parent=103 // loop_body
                %v2588 = vld [vmem:[%s2586] sm:%s2577]
                %2589 = vst [vmem:[%s2587] sm:%s2577] %v2588
                %v2590 = vld [vmem:[%s2586 + $0x8] sm:%s2577]
                %2591 = vst [vmem:[%s2587 + $0x8] sm:%s2577] %v2590
                %v2592 = vld [vmem:[%s2586 + $0x10] sm:%s2577]
                %2593 = vst [vmem:[%s2587 + $0x10] sm:%s2577] %v2592
                %v2594 = vld [vmem:[%s2586 + $0x18] sm:%s2577]
                %2595 = vst [vmem:[%s2587 + $0x18] sm:%s2577] %v2594
                %v2596 = vld [vmem:[%s2586 + $0x20] sm:%s2577]
                %2597 = vst [vmem:[%s2587 + $0x20] sm:%s2577] %v2596
                %v2598 = vld [vmem:[%s2586 + $0x28] sm:%s2577]
                %2599 = vst [vmem:[%s2587 + $0x28] sm:%s2577] %v2598
                %v2600 = vld [vmem:[%s2586 + $0x30] sm:%s2577]
                %2601 = vst [vmem:[%s2587 + $0x30] sm:%s2577] %v2600
                %v2602 = vld [vmem:[%s2586 + $0x38] sm:%s2577]
                %2603 = vst [vmem:[%s2587 + $0x38] sm:%s2577] %v2602
                %v2604 = vld [vmem:[%s2586 + $0x40] sm:%s2577]
                %2605 = vst [vmem:[%s2587 + $0x40] sm:%s2577] %v2604
                %v2606 = vld [vmem:[%s2586 + $0x48] sm:%s2577]
                %2607 = vst [vmem:[%s2587 + $0x48] sm:%s2577] %v2606
                %v2608 = vld [vmem:[%s2586 + $0x50] sm:%s2577]
                %2609 = vst [vmem:[%s2587 + $0x50] sm:%s2577] %v2608
                %v2610 = vld [vmem:[%s2586 + $0x58] sm:%s2577]
                %2611 = vst [vmem:[%s2587 + $0x58] sm:%s2577] %v2610
                %v2612 = vld [vmem:[%s2586 + $0x60] sm:%s2577]
                %2613 = vst [vmem:[%s2587 + $0x60] sm:%s2577] %v2612
                %v2614 = vld [vmem:[%s2586 + $0x68] sm:%s2577]
                %2615 = vst [vmem:[%s2587 + $0x68] sm:%s2577] %v2614
                %v2616 = vld [vmem:[%s2586 + $0x70] sm:%s2577]
                %2617 = vst [vmem:[%s2587 + $0x70] sm:%s2577] %v2616
                %v2618 = vld [vmem:[%s2586 + $0x78] sm:%s2577]
                %2619 = vst [vmem:[%s2587 + $0x78] sm:%s2577] %v2618
                %s2620 = sadd.s32 1, %s2585
                %p2621 = scmp.ge.s32.totalorder %s2620, %s2578
                %s2622 = scalar_select %p2621, 0, %s2620
                %s2623 = smul.u32 %s2622, 128
                %s2624 = smul.u32 %s2622, 128
                %s2625 = scalar_lea.vmem %s2557, %s2623 [#allocation16]
                %s2626 = scalar_lea.vmem %s2568, %s2624
              $region109: #{tpu_custom_call.1} parent=103 // loop_footer
                %s2582 = sadd.s32 %s2580, 1
              $region110: #{tpu_custom_call.1} parent=103 // loop_footer_branch
                %2579 = sbr.rel target = $region106
              $region111: #{tpu_custom_call.1} parent=103 // loop_exit
                _
              %s2627 = sshrl.u32 %s2564, 4
              %s2628 = sand.u32 %s2564, 15
              %s2629 = smul.u32 %s2627, 16
              %s2630 = smul.u32 8, %s2629
              %s2631 = scalar_lea.vmem %s2557, %s2630 [#allocation16]
              %s2632 = smul.u32 8, %s2629
              %s2633 = scalar_lea.vmem %s2568, %s2632
              // While loop
              $region112: #{tpu_custom_call.1} parent=103 // loop_pre_header
                _
              $region113: #{tpu_custom_call.1} parent=103 // loop_header
                %s2635 = sphi 0, %s2637
                %p2636 = scmp.ge.s32.totalorder %s2635, %s2628
                %s2640 = sphi 0, %s2647
                %s2641 = sphi %s2631, %s2650
                %s2642 = sphi %s2633, %s2651
              $region114: #{tpu_custom_call.1} parent=103 // loop_header_branch
                %2639 = sbr.rel (%p2636) target = $region118
              $region115: #{tpu_custom_call.1} parent=103 // loop_body
                %v2643 = vld [vmem:[%s2641] sm:%s2577]
                %2644 = vst [vmem:[%s2642] sm:%s2577] %v2643
                %s2645 = sadd.s32 1, %s2640
                %p2646 = scmp.ge.s32.totalorder %s2645, %s2628
                %s2647 = scalar_select %p2646, 0, %s2645
                %s2648 = smul.u32 %s2647, 8
                %s2649 = smul.u32 %s2647, 8
                %s2650 = scalar_lea.vmem %s2631, %s2648 [#allocation16]
                %s2651 = scalar_lea.vmem %s2633, %s2649
              $region116: #{tpu_custom_call.1} parent=103 // loop_footer
                %s2637 = sadd.s32 %s2635, 1
              $region117: #{tpu_custom_call.1} parent=103 // loop_footer_branch
                %2634 = sbr.rel target = $region113
              $region118: #{tpu_custom_call.1} parent=103 // loop_exit
                _
            $region104: #{tpu_custom_call.1} parent=95 // pred_fallthru
              _
          $region96: #{tpu_custom_call.1} parent=91 // pred_fallthru
            _
          %2730 = vnop
        $region92: #{tpu_custom_call.1} parent=55 // pred_fallthru
          _
      $region56: #{tpu_custom_call.1} parent=5 // pred_fallthru
        _
      %p2731 = scmp.le.s32.totalorder 2, %s26
      // Predicated region
      $region141: #{tpu_custom_call.1} parent=5 // pred_check
        %p2732 = pneg %p2731
      $region142: #{tpu_custom_call.1} parent=5 // pred_check_branch
        %2734 = sbr.rel (%p2732) target = $region144
      $region143: #{tpu_custom_call.1} parent=5 // pred_region
        %s2735 = ssub.s32 %s26, 2
        // Predicated region
        $region145: #{tpu_custom_call.1} parent=143 // pred_check
          %p2736 = pneg %p254
        $region146: #{tpu_custom_call.1} parent=143 // pred_check_branch
          %2738 = sbr.rel (%p2736) target = $region148
        $region147: #{tpu_custom_call.1} parent=143 // pred_region
          %s2739 = sand.u32 %s239, 1
          %s2740 = sand.u32 %s239, 1
          %s2741 = smul.addr %s2740, 128
          %s2742 = scalar_lea.vmem [#allocation16], %s2741
        $region148: #{tpu_custom_call.1} parent=143 // pred_fallthru
          _
      $region144: #{tpu_custom_call.1} parent=5 // pred_fallthru
        _
    $region6: #{tpu_custom_call.1} parent=1 // loop_footer
      %s30 = sadd.s32 1, %s26
    $region7: #{tpu_custom_call.1} parent=1 // loop_footer_branch
      %25 = sbr.rel target = $region3
    $region8: #{tpu_custom_call.1} parent=1 // loop_exit
      _
    %2743 = vsyncpa [#allocation4], 1
    %s2744 = scalar_lea.sflag [#allocation4], 1
    %2745 = vsyncpa %s2744, 1
    %2746 = vsyncpa [#allocation6], 1
    %s2747 = scalar_lea.sflag [#allocation6], 1
    %2748 = vsyncpa %s2747, 1
    %2749 = vsyncpa [#allocation9], 1
    %2750 = vsyncpa [#allocation12], 1
    %2751 = vsyncpa [#allocation15], 1

</llo_original>
